<compile_context>
chip_gen: v7x
topology: tpu7x:2x2x1
jax: 0.10.0
libtpu: 0.0.40
codegen_flags: <defaults>
</compile_context>

<pallas_src>
import functools

import numpy as np

import jax
import jax.numpy as jnp
from jax.experimental import pallas as pl
from jax.experimental.pallas import tpu as pltpu

LANE = 128                       # TPU lane width; feature dims padded to multiples of this
ALPHA_LANES = 128                # lane-padded width of per-head attention logits
NEG_SLOPE = 0.2                  # GATConv leaky_relu default
VMEM_LIMIT = 48 * 1024 * 1024    # explicit scoped-VMEM budget (safe on v5e/v6e/v7x)

TM_DEFAULT = 128                 # target-row tile
TK_DEFAULT = 256                 # source-row tile (also projection row tile)


def _round_up(x, m):
    return (x + m - 1) // m * m


def _pad_rows(a, n):
    if a.shape[0] == n:
        return a
    if a.shape[0] > n:
        return a[:n]
    pad = jnp.zeros((n - a.shape[0],) + a.shape[1:], a.dtype)
    return jnp.concatenate([a, pad], axis=0)


# --------------------------------------------------------------------------------------
# Kernel 1: per-node projection  x_proj[h] = x @ W[h]  + attention logits
# --------------------------------------------------------------------------------------
def _gat_project_kernel(x_ref, w_ref, asrc_ref, adst_ref,
                        xp_ref, alphas_ref, alphad_ref, *, heads):
    x = x_ref[...]                                              # [TN, Cin_p] f32
    as_cols, ad_cols = [], []
    for h in range(heads):
        xp_h = jnp.dot(x, w_ref[h], preferred_element_type=jnp.float32)   # [TN, C_p]
        xp_ref[h] = xp_h.astype(xp_ref.dtype)                   # bf16 messages
        as_cols.append(jnp.sum(xp_h * asrc_ref[h], axis=-1, keepdims=True))
        ad_cols.append(jnp.sum(xp_h * adst_ref[h], axis=-1, keepdims=True))
    pad = ALPHA_LANES - heads
    if pad > 0:
        zeros = jnp.zeros((x.shape[0], pad), jnp.float32)
        as_cols.append(zeros)
        ad_cols.append(zeros)
    alphas_ref[...] = jnp.concatenate(as_cols, axis=-1)
    alphad_ref[...] = jnp.concatenate(ad_cols, axis=-1)


def gat_project(x_pad, layer, *, tk):
    heads, c_p, c_in_p = layer["heads"], layer["c_head_p"], layer["c_in_p"]
    n_p = x_pad.shape[0]
    kernel = functools.partial(_gat_project_kernel, heads=heads)
    return pl.pallas_call(
        kernel,
        out_shape=(
            jax.ShapeDtypeStruct((heads, n_p, c_p), jnp.bfloat16),        # x_proj (head-major)
            jax.ShapeDtypeStruct((n_p, ALPHA_LANES), jnp.float32),        # alpha_src
            jax.ShapeDtypeStruct((n_p, ALPHA_LANES), jnp.float32),        # alpha_dst
        ),
        grid_spec=pltpu.PrefetchScalarGridSpec(
            num_scalar_prefetch=0,
            grid=(n_p // tk,),
            in_specs=[
                pl.BlockSpec((tk, c_in_p), lambda i: (i, 0)),
                pl.BlockSpec((heads, c_in_p, c_p), lambda i: (0, 0, 0)),
                pl.BlockSpec((heads, 1, c_p), lambda i: (0, 0, 0)),
                pl.BlockSpec((heads, 1, c_p), lambda i: (0, 0, 0)),
            ],
            out_specs=[
                pl.BlockSpec((heads, tk, c_p), lambda i: (0, i, 0)),
                pl.BlockSpec((tk, ALPHA_LANES), lambda i: (i, 0)),
                pl.BlockSpec((tk, ALPHA_LANES), lambda i: (i, 0)),
            ],
        ),
        compiler_params=pltpu.CompilerParams(
            dimension_semantics=("parallel",),
            vmem_limit_bytes=VMEM_LIMIT),
    )(x_pad, layer["w"], layer["att_src"], layer["att_dst"])


# --------------------------------------------------------------------------------------
# Kernel 2: attention softmax + aggregation, tiled (target parallel x source reduction)
# --------------------------------------------------------------------------------------
def _gat_attn_kernel(adj_ref, adst_ref, shift_ref, asrct_ref, xp_ref,
                     bias_ref, bnscale_ref, bnshift_ref, o_ref,
                     l_ref, acc_ref, *,
                     heads, concat, apply_relu, apply_log_softmax, c_out_true):
    k = pl.program_id(1)

    @pl.when(k == 0)
    def _():
        l_ref[...] = jnp.zeros_like(l_ref)
        acc_ref[...] = jnp.zeros_like(acc_ref)

    cnt = adj_ref[...].astype(jnp.float32)                       # [TM, TK] edge counts
    for h in range(heads):
        s = adst_ref[:, h:h + 1] + asrct_ref[h:h + 1, :]         # [TM, TK]
        s = jnp.where(s >= 0, s, NEG_SLOPE * s)                  # LeakyReLU
        # shift >= every edge score for this row, so exp() never overflows; the shift
        # cancels in the normalization at the end.
        p = cnt * jnp.exp(s - shift_ref[:, h:h + 1])             # masked, stabilized
        l_ref[h] = l_ref[h] + jnp.sum(p, axis=1, keepdims=True)
        acc_ref[h] = acc_ref[h] + jnp.dot(
            p.astype(jnp.bfloat16), xp_ref[h], preferred_element_type=jnp.float32)

    @pl.when(k == pl.num_programs(1) - 1)
    def _():
        outs = []
        for h in range(heads):
            inv = pl.reciprocal(jnp.maximum(l_ref[h], 1e-12), approx=True)
            outs.append(acc_ref[h] * inv)
        if concat:
            res = jnp.concatenate(outs, axis=-1)                 # [TM, heads*C_p]
        else:
            res = outs[0]
            for h in range(1, heads):
                res = res + outs[h]
            res = res * (1.0 / heads)                            # mean over heads
        res = res + bias_ref[...]
        res = res * bnscale_ref[...] + bnshift_ref[...]          # eval-mode BatchNorm affine
        if apply_relu:
            res = jnp.maximum(res, 0.0)
            # F.dropout(training=False) is the identity in eval mode.
        if apply_log_softmax:
            lane = jax.lax.broadcasted_iota(jnp.int32, res.shape, 1)
            masked = jnp.where(lane < c_out_true, res, -1e30)    # ignore padded lanes
            m = jnp.max(masked, axis=-1, keepdims=True)
            lse = m + jnp.log(jnp.sum(jnp.exp(masked - m), axis=-1, keepdims=True))
            res = res - lse
        o_ref[...] = res.astype(o_ref.dtype)


def gat_attention(adj_cnt, a_dst, shift, a_src_t, xp, layer, *,
                  apply_relu, apply_log_softmax, tm, tk):
    heads, c_p, out_p = layer["heads"], layer["c_head_p"], layer["out_p"]
    n_tgt_p, n_src_p = adj_cnt.shape
    asub = a_src_t.shape[0]
    kernel = functools.partial(
        _gat_attn_kernel, heads=heads, concat=layer["concat"],
        apply_relu=apply_relu, apply_log_softmax=apply_log_softmax,
        c_out_true=layer["c_out_true"])
    return pl.pallas_call(
        kernel,
        out_shape=jax.ShapeDtypeStruct((n_tgt_p, out_p), jnp.float32),
        grid_spec=pltpu.PrefetchScalarGridSpec(
            num_scalar_prefetch=0,
            grid=(n_tgt_p // tm, n_src_p // tk),
            in_specs=[
                pl.BlockSpec((tm, tk), lambda i, k: (i, k)),              # adjacency counts (bf16)
                pl.BlockSpec((tm, ALPHA_LANES), lambda i, k: (i, 0)),     # alpha_dst
                pl.BlockSpec((tm, ALPHA_LANES), lambda i, k: (i, 0)),     # softmax shift
                pl.BlockSpec((asub, tk), lambda i, k: (0, k)),            # alpha_src^T
                pl.BlockSpec((heads, tk, c_p), lambda i, k: (0, k, 0)),   # x_proj (bf16)
                pl.BlockSpec((1, out_p), lambda i, k: (0, 0)),            # bias
                pl.BlockSpec((1, out_p), lambda i, k: (0, 0)),            # BN scale
                pl.BlockSpec((1, out_p), lambda i, k: (0, 0)),            # BN shift
            ],
            out_specs=pl.BlockSpec((tm, out_p), lambda i, k: (i, 0)),
            scratch_shapes=[
                pltpu.VMEM((heads, tm, 1), jnp.float32),      # softmax denominators
                pltpu.VMEM((heads, tm, c_p), jnp.float32),    # per-head accumulators
            ],
        ),
        compiler_params=pltpu.CompilerParams(
            dimension_semantics=("parallel", "arbitrary"),
            vmem_limit_bytes=VMEM_LIMIT),
    )(adj_cnt, a_dst, shift, a_src_t, xp,
      layer["bias"], layer["bn_scale"], layer["bn_shift"])


# --------------------------------------------------------------------------------------
# Wrapper-side helpers (adjacency counts, parameter packing, forward pass)
# --------------------------------------------------------------------------------------
def build_adj_counts(edge_index, n_src, n_tgt, n_src_p, n_tgt_p, *, add_self_loops=True):
    """Edge multiplicity matrix cnt[i, j] = #edges j->i (GATConv remove+add self loops)."""
    src, dst = edge_index[0], edge_index[1]
    keep = jnp.ones(src.shape, jnp.float32)
    if add_self_loops:
        keep = jnp.where(src == dst, 0.0, keep)                  # remove_self_loops
    cnt = jnp.zeros((n_tgt_p, n_src_p), jnp.float32).at[dst, src].add(keep)
    if add_self_loops:
        diag = jnp.arange(n_tgt)
        cnt = cnt.at[diag, diag].add(1.0)                        # add_self_loops(num_nodes=n_tgt)
    return cnt.astype(jnp.bfloat16)                              # halve HBM traffic; counts exact


def _glorot(key, shape, fan_in, fan_out):
    limit = (6.0 / (fan_in + fan_out)) ** 0.5
    return jax.random.uniform(key, shape, jnp.float32, -limit, limit)


def _pack_gat_layer(key, c_in_true, c_head, heads, concat, in_pos, c_in_p, *, use_bn):
    assert len(in_pos) == c_in_true
    c_p = _round_up(c_head, LANE)
    c_out_true = heads * c_head if concat else c_head
    out_p = heads * c_p if concat else c_p

    k1, k2, k3 = jax.random.split(key, 3)
    w = _glorot(k1, (c_in_true, heads, c_head), c_in_true, heads * c_head)
    att_src = _glorot(k2, (heads, c_head), c_head, 1)
    att_dst = _glorot(k3, (heads, c_head), c_head, 1)
    bias = jnp.zeros((c_out_true,), jnp.float32)

    if use_bn:   # eval-mode BatchNorm1d folded into a per-channel affine
        gamma = jnp.ones((c_out_true,), jnp.float32)
        beta = jnp.zeros((c_out_true,), jnp.float32)
        r_mean = jnp.zeros((c_out_true,), jnp.float32)
        r_var = jnp.ones((c_out_true,), jnp.float32)
        bn_scale = gamma * jax.lax.rsqrt(r_var + 1e-5)
        bn_shift = beta - r_mean * bn_scale
    else:
        bn_scale = jnp.ones((c_out_true,), jnp.float32)
        bn_shift = jnp.zeros((c_out_true,), jnp.float32)

    in_pos_j = jnp.asarray(in_pos, jnp.int32)
    w_pad = jnp.zeros((heads, c_in_p, c_p), jnp.float32)
    w_pad = w_pad.at[:, in_pos_j, :c_head].set(jnp.transpose(w, (1, 0, 2)))
    asrc_pad = jnp.zeros((heads, 1, c_p), jnp.float32).at[:, 0, :c_head].set(att_src)
    adst_pad = jnp.zeros((heads, 1, c_p), jnp.float32).at[:, 0, :c_head].set(att_dst)

    if concat:
        out_pos = np.concatenate(
            [h * c_p + np.arange(c_head) for h in range(heads)]).astype(np.int32)
    else:
        out_pos = np.arange(c_head, dtype=np.int32)
    out_pos_j = jnp.asarray(out_pos)
    bias_pad = jnp.zeros((1, out_p), jnp.float32).at[0, out_pos_j].set(bias)
    bn_scale_pad = jnp.ones((1, out_p), jnp.float32).at[0, out_pos_j].set(bn_scale)
    bn_shift_pad = jnp.zeros((1, out_p), jnp.float32).at[0, out_pos_j].set(bn_shift)

    return {
        "heads": heads, "c_head": c_head, "c_head_p": c_p,
        "c_in_p": c_in_p, "concat": concat,
        "c_out_true": c_out_true, "out_p": out_p, "out_pos": out_pos,
        "w": w_pad, "att_src": asrc_pad, "att_dst": adst_pad,
        "bias": bias_pad, "bn_scale": bn_scale_pad, "bn_shift": bn_shift_pad,
    }


def init_gat_params(key, in_channels, hidden_channels, out_channels, num_layers, layer_heads):
    """Mirrors GAT_NeighSampler.__init__ layer configuration (intended architecture)."""
    cfgs = []
    if len(layer_heads) > 1:
        cfgs.append((in_channels, hidden_channels, layer_heads[0], True))
        for i in range(1, num_layers - 1):
            cfgs.append((hidden_channels * layer_heads[i - 1], hidden_channels,
                         layer_heads[i], True))
        cfgs.append((hidden_channels * layer_heads[num_layers - 2], out_channels,
                     layer_heads[num_layers - 1], False))
    else:
        cfgs.append((in_channels, out_channels, layer_heads[0], False))

    layers = []
    in_pos = np.arange(in_channels, dtype=np.int32)
    c_in_p = _round_up(in_channels, LANE)
    for li, (c_in_true, c_head, heads, concat) in enumerate(cfgs):
        key, kl = jax.random.split(key)
        is_last = li == len(cfgs) - 1
        layer = _pack_gat_layer(kl, c_in_true, c_head, heads, concat, in_pos, c_in_p,
                                use_bn=not is_last)
        layers.append(layer)
        in_pos = layer["out_pos"]
        c_in_p = layer["out_p"]
    return layers


def gat_forward(x, adjs, layers, *, tm=TM_DEFAULT, tk=TK_DEFAULT):
    """adjs: list of (edge_index [2,E] int32, size=(n_src, n_tgt)), outermost hop first."""
    num_layers = len(layers)
    l0 = layers[0]
    x = x.astype(jnp.float32)
    x_pad = jnp.zeros((x.shape[0], l0["c_in_p"]), jnp.float32)
    x_pad = x_pad.at[:, jnp.asarray(l0["out_pos"] if False else np.arange(x.shape[1]))].set(x)

    for i, (edge_index, size) in enumerate(adjs):
        layer = layers[i]
        n_src, n_tgt = int(size[0]), int(size[1])
        is_last = i == num_layers - 1
        n_src_p = _round_up(n_src, tk)
        n_tgt_p = _round_up(n_tgt, tm)
        asub = _round_up(layer["heads"], 8)

        xs = _pad_rows(x_pad[:n_src], n_src_p)
        xp, a_src, a_dst = gat_project(xs, layer, tk=tk)

        adj_cnt = build_adj_counts(edge_index, n_src, n_tgt, n_src_p, n_tgt_p)

        # Per-target-row softmax shift: >= every edge score (leaky_relu is monotone).
        max_src = jnp.max(a_src[:n_src], axis=0, keepdims=True)          # [1, 128]
        a_dst_rows = _pad_rows(a_dst[:n_tgt], n_tgt_p)                   # [n_tgt_p, 128]
        pre = a_dst_rows + max_src
        shift = jnp.where(pre >= 0, pre, NEG_SLOPE * pre)
        a_src_t = jnp.transpose(a_src)[:asub, :]                         # [asub, n_src_p]

        out = gat_attention(adj_cnt, a_dst_rows, shift, a_src_t, xp, layer,
                            apply_relu=not is_last, apply_log_softmax=is_last,
                            tm=tm, tk=tk)
        if is_last:
            return out[:n_tgt, :layer["c_out_true"]]
        x_pad = out[:n_tgt]   # padded channel layout matches next layer's packed weights
    return x_pad


if __name__ == "__main__":
    key = jax.random.PRNGKey(0)

    in_channels, hidden_channels, out_channels = 16, 32, 8
    num_layers = 2
    layer_heads = [2, 2]
    # NeighborSampler-style hop sizes, outermost hop first: layer i maps n_nodes[i] -> n_nodes[i+1]
    n_nodes = [600, 300, 150]
    n_edges = [2400, 1200]

    key, kx = jax.random.split(key)
    x = jax.random.normal(kx, (n_nodes[0], in_channels), jnp.float32)

    adjs = []
    for i in range(num_layers):
        key, ks, kt = jax.random.split(key, 3)
        src = jax.random.randint(ks, (n_edges[i],), 0, n_nodes[i], jnp.int32)
        tgt = jax.random.randint(kt, (n_edges[i],), 0, n_nodes[i + 1], jnp.int32)
        adjs.append((jnp.stack([src, tgt], axis=0), (n_nodes[i], n_nodes[i + 1])))

    key, kp = jax.random.split(key)
    layers = init_gat_params(kp, in_channels, hidden_channels, out_channels,
                             num_layers, layer_heads)

    out = gat_forward(x, adjs, layers)
    out = jax.block_until_ready(out)

    assert out.shape == (n_nodes[-1], out_channels)
    assert bool(jnp.all(jnp.isfinite(out)))
    # rows of log_softmax output must exp-sum to 1
    assert bool(jnp.allclose(jnp.sum(jnp.exp(out), axis=-1), 1.0, atol=1e-3))
    print("KERNEL_OK")
</pallas_src>

<mosaic_0001>
module attributes {stable_mosaic.version = 11 : i64} {
  func.func @_gat_project_kernel(%arg0: i32, %arg1: memref<256x128xf32, #tpu.memory_space<vmem>>, %arg2: memref<2x128x128xf32, #tpu.memory_space<vmem>>, %arg3: memref<2x1x128xf32, #tpu.memory_space<vmem>>, %arg4: memref<2x1x128xf32, #tpu.memory_space<vmem>>, %arg5: memref<2x256x128xbf16, #tpu.memory_space<vmem>>, %arg6: memref<256x128xf32, #tpu.memory_space<vmem>>, %arg7: memref<256x128xf32, #tpu.memory_space<vmem>>) attributes {dimension_semantics = [#tpu.dimension_semantics<parallel>], iteration_bounds = array<i64: 3>, scalar_prefetch = 0 : i64, scratch_operands = 0 : i64, tpu.core_type = #tpu.core_type<tc>, window_params = [{transform_indices = @transform_0, window_bounds = array<i64: 256, 128>}, {pipeline_mode = #tpu.pipeline_mode<synchronous>, transform_indices = @transform_1, window_bounds = array<i64: 2, 128, 128>}, {pipeline_mode = #tpu.pipeline_mode<synchronous>, transform_indices = @transform_2, window_bounds = array<i64: 2, 1, 128>}, {pipeline_mode = #tpu.pipeline_mode<synchronous>, transform_indices = @transform_3, window_bounds = array<i64: 2, 1, 128>}, {transform_indices = @transform_4, window_bounds = array<i64: 2, 256, 128>}, {transform_indices = @transform_5, window_bounds = array<i64: 256, 128>}, {transform_indices = @transform_6, window_bounds = array<i64: 256, 128>}]} {
    %c0 = arith.constant 0 : index
    %c0_0 = arith.constant 0 : index
    %0 = vector.load %arg1[%c0, %c0_0] : memref<256x128xf32, #tpu.memory_space<vmem>>, vector<256x128xf32>
    %c0_1 = arith.constant 0 : index
    %c0_2 = arith.constant 0 : index
    %c0_3 = arith.constant 0 : index
    %1 = vector.load %arg2[%c0_1, %c0_2, %c0_3] : memref<2x128x128xf32, #tpu.memory_space<vmem>>, vector<1x128x128xf32>
    %2 = vector.shape_cast %1 : vector<1x128x128xf32> to vector<128x128xf32>
    %cst = arith.constant dense<0.000000e+00> : vector<256x128xf32>
    %3 = tpu.matmul %0, %2, %cst {dimension_numbers = #tpu.dot_dimension_numbers<[1], [0], [0], [1], [0, 0, 1, 1], [], []>} : vector<256x128xf32>, vector<128x128xf32>, vector<256x128xf32> -> vector<256x128xf32>
    %4 = arith.truncf %3 : vector<256x128xf32> to vector<256x128xbf16>
    %c0_4 = arith.constant 0 : index
    %c0_5 = arith.constant 0 : index
    %c0_6 = arith.constant 0 : index
    %5 = vector.load %arg5[%c0_4, %c0_5, %c0_6] : memref<2x256x128xbf16, #tpu.memory_space<vmem>>, vector<1x256x128xbf16>
    %6 = vector.shape_cast %5 : vector<1x256x128xbf16> to vector<256x128xbf16>
    %7 = vector.shape_cast %4 : vector<256x128xbf16> to vector<1x256x128xbf16>
    tpu.vector_store %arg5[%c0_4, %c0_5, %c0_6], %7 {strides = array<i32>} : memref<2x256x128xbf16, #tpu.memory_space<vmem>>, vector<1x256x128xbf16>,
    %c0_7 = arith.constant 0 : index
    %c0_8 = arith.constant 0 : index
    %c0_9 = arith.constant 0 : index
    %8 = vector.load %arg3[%c0_7, %c0_8, %c0_9] : memref<2x1x128xf32, #tpu.memory_space<vmem>>, vector<1x1x128xf32>
    %9 = vector.shape_cast %8 : vector<1x1x128xf32> to vector<1x128xf32>
    %10 = vector.broadcast %9 : vector<1x128xf32> to vector<256x128xf32>
    %11 = arith.mulf %3, %10 : vector<256x128xf32>
    %cst_10 = arith.constant dense<0.000000e+00> : vector<256xf32>
    %12 = vector.multi_reduction <add>, %11, %cst_10 [1] : vector<256x128xf32> to vector<256xf32>
    %13 = vector.shape_cast %12 : vector<256xf32> to vector<256x1xf32>
    %c0_11 = arith.constant 0 : index
    %c0_12 = arith.constant 0 : index
    %c0_13 = arith.constant 0 : index
    %14 = vector.load %arg4[%c0_11, %c0_12, %c0_13] : memref<2x1x128xf32, #tpu.memory_space<vmem>>, vector<1x1x128xf32>
    %15 = vector.shape_cast %14 : vector<1x1x128xf32> to vector<1x128xf32>
    %16 = vector.broadcast %15 : vector<1x128xf32> to vector<256x128xf32>
    %17 = arith.mulf %3, %16 : vector<256x128xf32>
    %cst_14 = arith.constant dense<0.000000e+00> : vector<256xf32>
    %18 = vector.multi_reduction <add>, %17, %cst_14 [1] : vector<256x128xf32> to vector<256xf32>
    %19 = vector.shape_cast %18 : vector<256xf32> to vector<256x1xf32>
    %c1 = arith.constant 1 : index
    %c0_15 = arith.constant 0 : index
    %c0_16 = arith.constant 0 : index
    %20 = vector.load %arg2[%c1, %c0_15, %c0_16] : memref<2x128x128xf32, #tpu.memory_space<vmem>>, vector<1x128x128xf32>
    %21 = vector.shape_cast %20 : vector<1x128x128xf32> to vector<128x128xf32>
    %cst_17 = arith.constant dense<0.000000e+00> : vector<256x128xf32>
    %22 = tpu.matmul %0, %21, %cst_17 {dimension_numbers = #tpu.dot_dimension_numbers<[1], [0], [0], [1], [0, 0, 1, 1], [], []>} : vector<256x128xf32>, vector<128x128xf32>, vector<256x128xf32> -> vector<256x128xf32>
    %23 = arith.truncf %22 : vector<256x128xf32> to vector<256x128xbf16>
    %c1_18 = arith.constant 1 : index
    %c0_19 = arith.constant 0 : index
    %c0_20 = arith.constant 0 : index
    %24 = vector.load %arg5[%c1_18, %c0_19, %c0_20] : memref<2x256x128xbf16, #tpu.memory_space<vmem>>, vector<1x256x128xbf16>
    %25 = vector.shape_cast %24 : vector<1x256x128xbf16> to vector<256x128xbf16>
    %26 = vector.shape_cast %23 : vector<256x128xbf16> to vector<1x256x128xbf16>
    tpu.vector_store %arg5[%c1_18, %c0_19, %c0_20], %26 {strides = array<i32>} : memref<2x256x128xbf16, #tpu.memory_space<vmem>>, vector<1x256x128xbf16>,
    %c1_21 = arith.constant 1 : index
    %c0_22 = arith.constant 0 : index
    %c0_23 = arith.constant 0 : index
    %27 = vector.load %arg3[%c1_21, %c0_22, %c0_23] : memref<2x1x128xf32, #tpu.memory_space<vmem>>, vector<1x1x128xf32>
    %28 = vector.shape_cast %27 : vector<1x1x128xf32> to vector<1x128xf32>
    %29 = vector.broadcast %28 : vector<1x128xf32> to vector<256x128xf32>
    %30 = arith.mulf %22, %29 : vector<256x128xf32>
    %cst_24 = arith.constant dense<0.000000e+00> : vector<256xf32>
    %31 = vector.multi_reduction <add>, %30, %cst_24 [1] : vector<256x128xf32> to vector<256xf32>
    %32 = vector.shape_cast %31 : vector<256xf32> to vector<256x1xf32>
    %c1_25 = arith.constant 1 : index
    %c0_26 = arith.constant 0 : index
    %c0_27 = arith.constant 0 : index
    %33 = vector.load %arg4[%c1_25, %c0_26, %c0_27] : memref<2x1x128xf32, #tpu.memory_space<vmem>>, vector<1x1x128xf32>
    %34 = vector.shape_cast %33 : vector<1x1x128xf32> to vector<1x128xf32>
    %35 = vector.broadcast %34 : vector<1x128xf32> to vector<256x128xf32>
    %36 = arith.mulf %22, %35 : vector<256x128xf32>
    %cst_28 = arith.constant dense<0.000000e+00> : vector<256xf32>
    %37 = vector.multi_reduction <add>, %36, %cst_28 [1] : vector<256x128xf32> to vector<256xf32>
    %38 = vector.shape_cast %37 : vector<256xf32> to vector<256x1xf32>
    %cst_29 = arith.constant 0.000000e+00 : f32
    %39 = vector.broadcast %cst_29 : f32 to vector<256x126xf32>
    %40 = tpu.concatenate %13, %32, %39 in 1 : vector<256x1xf32>, vector<256x1xf32>, vector<256x126xf32> -> vector<256x128xf32>
    %c0_30 = arith.constant 0 : index
    %c0_31 = arith.constant 0 : index
    %41 = vector.load %arg6[%c0_30, %c0_31] : memref<256x128xf32, #tpu.memory_space<vmem>>, vector<256x128xf32>
    tpu.vector_store %arg6[%c0_30, %c0_31], %40 {strides = array<i32>} : memref<256x128xf32, #tpu.memory_space<vmem>>, vector<256x128xf32>,
    %42 = tpu.concatenate %19, %38, %39 in 1 : vector<256x1xf32>, vector<256x1xf32>, vector<256x126xf32> -> vector<256x128xf32>
    %c0_32 = arith.constant 0 : index
    %c0_33 = arith.constant 0 : index
    %43 = vector.load %arg7[%c0_32, %c0_33] : memref<256x128xf32, #tpu.memory_space<vmem>>, vector<256x128xf32>
    tpu.vector_store %arg7[%c0_32, %c0_33], %42 {strides = array<i32>} : memref<256x128xf32, #tpu.memory_space<vmem>>, vector<256x128xf32>,
    return
  }
  func.func @transform_0(%arg0: i32) -> (i32, i32) {
    %c0_i32 = arith.constant 0 : i32
    %c0_i32_0 = arith.constant 0 : i32
    return %arg0, %c0_i32 : i32, i32
  }
  func.func @transform_1(%arg0: i32) -> (i32, i32, i32) {
    %c0_i32 = arith.constant 0 : i32
    %c0_i32_0 = arith.constant 0 : i32
    %c0_i32_1 = arith.constant 0 : i32
    %c0_i32_2 = arith.constant 0 : i32
    return %c0_i32, %c0_i32_0, %c0_i32_1 : i32, i32, i32
  }
  func.func @transform_2(%arg0: i32) -> (i32, i32, i32) {
    %c0_i32 = arith.constant 0 : i32
    %c0_i32_0 = arith.constant 0 : i32
    %c0_i32_1 = arith.constant 0 : i32
    %c0_i32_2 = arith.constant 0 : i32
    return %c0_i32, %c0_i32_0, %c0_i32_1 : i32, i32, i32
  }
  func.func @transform_3(%arg0: i32) -> (i32, i32, i32) {
    %c0_i32 = arith.constant 0 : i32
    %c0_i32_0 = arith.constant 0 : i32
    %c0_i32_1 = arith.constant 0 : i32
    %c0_i32_2 = arith.constant 0 : i32
    return %c0_i32, %c0_i32_0, %c0_i32_1 : i32, i32, i32
  }
  func.func @transform_4(%arg0: i32) -> (i32, i32, i32) {
    %c0_i32 = arith.constant 0 : i32
    %c0_i32_0 = arith.constant 0 : i32
    %c0_i32_1 = arith.constant 0 : i32
    return %c0_i32, %arg0, %c0_i32_0 : i32, i32, i32
  }
  func.func @transform_5(%arg0: i32) -> (i32, i32) {
    %c0_i32 = arith.constant 0 : i32
    %c0_i32_0 = arith.constant 0 : i32
    return %arg0, %c0_i32 : i32, i32
  }
  func.func @transform_6(%arg0: i32) -> (i32, i32) {
    %c0_i32 = arith.constant 0 : i32
    %c0_i32_0 = arith.constant 0 : i32
    return %arg0, %c0_i32 : i32, i32
  }
}

</mosaic_0001>

<llo_original>
// kernel: tpu_custom_call.1
$region0: #{tpu_custom_call.1}
  #allocation0 [shape = 'u32[]', space=smem, size = 0x4, offset = 0x4, fixed_abs, tag = 'smem constant byte address 0x4 - core index']
  #allocation1 [shape = 'u32[144,128]{1,0:T(1,128)}', space=vmem, size = 0x12000, scoped, tag = 'internal scratch']
  #allocation11 [shape = 's32[]', space=sflag, size = 0x4, offset = 0, fixed_abs, tag = 'sflag constant byte address 0x0 - dummy sync flag']
  %s0 = inlined_call_operand.hbm [shape: f32[768,128], index: 0, kind: input, shape index: {}]
  %s1 = inlined_call_operand.hbm [shape: f32[2,128,128], index: 1, kind: input, shape index: {}]
  %s2 = inlined_call_operand.vmem [shape: f32[2,1,128], index: 2, kind: input, shape index: {}]
  %s3 = inlined_call_operand.vmem [shape: f32[2,1,128], index: 3, kind: input, shape index: {}]
  %s4 = inlined_call_operand.hbm [shape: bf16[2,768,128], index: 4, kind: output, shape index: {0}]
  %s5 = inlined_call_operand.hbm [shape: f32[768,128], index: 5, kind: output, shape index: {1}]
  %s6 = inlined_call_operand.hbm [shape: f32[768,128], index: 6, kind: output, shape index: {2}]
  %7 = xla_tuple %s4, %s5, %s6
  %s8 = sld [smem:[#allocation0]]
  $region73: #{tpu_custom_call.1} parent=0
    _
  %s10 = ssub.s32 1, %s8
  %s11 = scalar_select 0, %s10, %s8
  $region1: #{tpu_custom_call.1} parent=0
    #allocation2 [shape = 'u8[262144]{0}', space=vmem, size = 0x40000, scoped, tag = 'input window, operand 0']
    #allocation3 [shape = 's32[2]{0}', space=sflag, size = 0x8, scoped, tag = 'scoped memory for tpu_custom_call.1']
    #allocation4 [shape = 's32[2]{0}', space=sflag, size = 0x8, scoped, tag = 'scoped memory for tpu_custom_call.1']
    #allocation5 [shape = 'u8[131072]{0}', space=vmem, size = 0x20000, scoped, tag = 'input window, operand 1, single buffered']
    #allocation6 [shape = 's32[1]{0}', space=sflag, size = 0x4, scoped, tag = 'scoped memory for tpu_custom_call.1']
    #allocation7 [shape = 'u8[262144]{0}', space=vmem, size = 0x40000, scoped, tag = 'output window, operand 0']
    #allocation8 [shape = 'u8[262144]{0}', space=vmem, size = 0x40000, scoped, tag = 'output window, operand 1']
    #allocation9 [shape = 's32[2]{0}', space=sflag, size = 0x8, scoped, tag = 'scoped memory for tpu_custom_call.1']
    #allocation10 [shape = 'u8[262144]{0}', space=vmem, size = 0x40000, scoped, tag = 'output window, operand 2']
    %12 = vsyncpa [#allocation3], 0
    %s13 = scalar_lea.sflag [#allocation3], 1
    %14 = vsyncpa %s13, 0
    %15 = vsyncpa [#allocation6], 0
    %16 = vsyncpa [#allocation4], 0
    %s17 = scalar_lea.sflag [#allocation4], 1
    %18 = vsyncpa %s17, 0
    %19 = vsyncpa [#allocation9], 0
    %s20 = scalar_lea.sflag [#allocation9], 1
    %21 = vsyncpa %s20, 0
    loop: start=0, step=1, limit=5
    $region2: #{tpu_custom_call.1} parent=1 // loop_pre_header
      _
    $region3: #{tpu_custom_call.1} parent=1 // loop_header
      %s23 = sphi 0, %s27
      %p24 = scmp.ge.s32.totalorder %s23, 5
      %s33 = sphi 0, %s35
      %s36 = sphi 0, %s33
      %s37 = sphi 0, %s36
      %s53 = sphi 0, %s37
      %s57 = sphi 0, %s57
      %s59 = sphi 0, %s57
      %s60 = sphi 0, %s59
      %s74 = sphi 0, %s60
      %s78 = sphi 0, %s78
      %s80 = sphi 0, %s78
      %s81 = sphi 0, %s80
      %s95 = sphi 0, %s81
      %s99 = sphi 0, %s99
      %s101 = sphi 0, %s99
      %s102 = sphi 0, %s101
      %s116 = sphi 0, %s102
      %s122 = sphi 0, %s124
      %s125 = sphi 0, %s122
      %s126 = sphi 0, %s125
      %s142 = sphi 0, %s126
      %s148 = sphi 0, %s150
      %s151 = sphi 0, %s148
      %s152 = sphi 0, %s151
      %s168 = sphi 0, %s152
      %s174 = sphi 0, %s176
      %s177 = sphi 0, %s174
      %s178 = sphi 0, %s177
      %s194 = sphi 0, %s178
    $region4: #{tpu_custom_call.1} parent=1 // loop_header_branch
      %26 = sbr.rel (%p24) target = $region8
    $region5: #{tpu_custom_call.1} parent=1 // loop_body
      %s28 = ssub.s32 %s23, 1
      %s29 = ssub.s32 %s23, 2
      %s30 = sadd.s32 %s23, 1
      %s31 = ssub.s32 %s23, %s30
      %p32 = scmp.eq.s32.totalorder %s31, 0
      %s34 = sadd.s32 %s33, 1
      %s35 = scalar_select %p32, %s33, %s34
      %p38 = pneg %p32
      %p39 = scmp.eq.s32.totalorder %s23, 2
      %p40 = por %p38, %p39
      %p41 = scmp.ne.s32.totalorder %s33, %s36
      %p42 = scmp.eq.s32.totalorder %s23, 0
      %p43 = por %p41, %p42
      %p44 = scmp.ne.s32.totalorder %s33, %s36
      %p45 = scmp.eq.s32.totalorder %s28, 2
      %p46 = por %p44, %p45
      %p47 = scmp.ne.s32.totalorder %s36, %s37
      %p48 = scmp.eq.s32.totalorder %s28, 0
      %p49 = por %p47, %p48
      %p50 = scmp.ne.s32.totalorder %s36, %s37
      %p51 = scmp.eq.s32.totalorder %s29, 2
      %p52 = por %p50, %p51
      %p54 = scmp.ne.s32.totalorder %s37, %s53
      %p55 = scmp.eq.s32.totalorder %s29, 0
      %p56 = por %p54, %p55
      %s58 = sadd.s32 %s57, 1
      %p61 = scmp.eq.s32.totalorder %s23, 2
      %p62 = scmp.ne.s32.totalorder %s57, %s59
      %p63 = scmp.eq.s32.totalorder %s23, 0
      %p64 = por %p62, %p63
      %p65 = scmp.ne.s32.totalorder %s57, %s59
      %p66 = scmp.eq.s32.totalorder %s28, 2
      %p67 = por %p65, %p66
      %p68 = scmp.ne.s32.totalorder %s59, %s60
      %p69 = scmp.eq.s32.totalorder %s28, 0
      %p70 = por %p68, %p69
      %p71 = scmp.ne.s32.totalorder %s59, %s60
      %p72 = scmp.eq.s32.totalorder %s29, 2
      %p73 = por %p71, %p72
      %p75 = scmp.ne.s32.totalorder %s60, %s74
      %p76 = scmp.eq.s32.totalorder %s29, 0
      %p77 = por %p75, %p76
      %s79 = sadd.s32 %s78, 1
      %p82 = scmp.eq.s32.totalorder %s23, 2
      %p83 = scmp.ne.s32.totalorder %s78, %s80
      %p84 = scmp.eq.s32.totalorder %s23, 0
      %p85 = por %p83, %p84
      %p86 = scmp.ne.s32.totalorder %s78, %s80
      %p87 = scmp.eq.s32.totalorder %s28, 2
      %p88 = por %p86, %p87
      %p89 = scmp.ne.s32.totalorder %s80, %s81
      %p90 = scmp.eq.s32.totalorder %s28, 0
      %p91 = por %p89, %p90
      %p92 = scmp.ne.s32.totalorder %s80, %s81
      %p93 = scmp.eq.s32.totalorder %s29, 2
      %p94 = por %p92, %p93
      %p96 = scmp.ne.s32.totalorder %s81, %s95
      %p97 = scmp.eq.s32.totalorder %s29, 0
      %p98 = por %p96, %p97
      %s100 = sadd.s32 %s99, 1
      %p103 = scmp.eq.s32.totalorder %s23, 2
      %p104 = scmp.ne.s32.totalorder %s99, %s101
      %p105 = scmp.eq.s32.totalorder %s23, 0
      %p106 = por %p104, %p105
      %p107 = scmp.ne.s32.totalorder %s99, %s101
      %p108 = scmp.eq.s32.totalorder %s28, 2
      %p109 = por %p107, %p108
      %p110 = scmp.ne.s32.totalorder %s101, %s102
      %p111 = scmp.eq.s32.totalorder %s28, 0
      %p112 = por %p110, %p111
      %p113 = scmp.ne.s32.totalorder %s101, %s102
      %p114 = scmp.eq.s32.totalorder %s29, 2
      %p115 = por %p113, %p114
      %p117 = scmp.ne.s32.totalorder %s102, %s116
      %p118 = scmp.eq.s32.totalorder %s29, 0
      %p119 = por %p117, %p118
      %s120 = ssub.s32 %s23, %s30
      %p121 = scmp.eq.s32.totalorder %s120, 0
      %s123 = sadd.s32 %s122, 1
      %s124 = scalar_select %p121, %s122, %s123
      %p127 = pneg %p121
      %p128 = scmp.eq.s32.totalorder %s23, 2
      %p129 = por %p127, %p128
      %p130 = scmp.ne.s32.totalorder %s122, %s125
      %p131 = scmp.eq.s32.totalorder %s23, 0
      %p132 = por %p130, %p131
      %p133 = scmp.ne.s32.totalorder %s122, %s125
      %p134 = scmp.eq.s32.totalorder %s28, 2
      %p135 = por %p133, %p134
      %p136 = scmp.ne.s32.totalorder %s125, %s126
      %p137 = scmp.eq.s32.totalorder %s28, 0
      %p138 = por %p136, %p137
      %p139 = scmp.ne.s32.totalorder %s125, %s126
      %p140 = scmp.eq.s32.totalorder %s29, 2
      %p141 = por %p139, %p140
      %p143 = scmp.ne.s32.totalorder %s126, %s142
      %p144 = scmp.eq.s32.totalorder %s29, 0
      %p145 = por %p143, %p144
      %s146 = ssub.s32 %s23, %s30
      %p147 = scmp.eq.s32.totalorder %s146, 0
      %s149 = sadd.s32 %s148, 1
      %s150 = scalar_select %p147, %s148, %s149
      %p153 = pneg %p147
      %p154 = scmp.eq.s32.totalorder %s23, 2
      %p155 = por %p153, %p154
      %p156 = scmp.ne.s32.totalorder %s148, %s151
      %p157 = scmp.eq.s32.totalorder %s23, 0
      %p158 = por %p156, %p157
      %p159 = scmp.ne.s32.totalorder %s148, %s151
      %p160 = scmp.eq.s32.totalorder %s28, 2
      %p161 = por %p159, %p160
      %p162 = scmp.ne.s32.totalorder %s151, %s152
      %p163 = scmp.eq.s32.totalorder %s28, 0
      %p164 = por %p162, %p163
      %p165 = scmp.ne.s32.totalorder %s151, %s152
      %p166 = scmp.eq.s32.totalorder %s29, 2
      %p167 = por %p165, %p166
      %p169 = scmp.ne.s32.totalorder %s152, %s168
      %p170 = scmp.eq.s32.totalorder %s29, 0
      %p171 = por %p169, %p170
      %s172 = ssub.s32 %s23, %s30
      %p173 = scmp.eq.s32.totalorder %s172, 0
      %s175 = sadd.s32 %s174, 1
      %s176 = scalar_select %p173, %s174, %s175
      %p179 = pneg %p173
      %p180 = scmp.eq.s32.totalorder %s23, 2
      %p181 = por %p179, %p180
      %p182 = scmp.ne.s32.totalorder %s174, %s177
      %p183 = scmp.eq.s32.totalorder %s23, 0
      %p184 = por %p182, %p183
      %p185 = scmp.ne.s32.totalorder %s174, %s177
      %p186 = scmp.eq.s32.totalorder %s28, 2
      %p187 = por %p185, %p186
      %p188 = scmp.ne.s32.totalorder %s177, %s178
      %p189 = scmp.eq.s32.totalorder %s28, 0
      %p190 = por %p188, %p189
      %p191 = scmp.ne.s32.totalorder %s177, %s178
      %p192 = scmp.eq.s32.totalorder %s29, 2
      %p193 = por %p191, %p192
      %p195 = scmp.ne.s32.totalorder %s178, %s194
      %p196 = scmp.eq.s32.totalorder %s29, 0
      %p197 = por %p195, %p196
      %p198 = scmp.le.s32.totalorder 1, %s23
      %p199 = scmp.lt.s32.totalorder %s23, 4
      %p200 = pnand %p198, %p199
      %p201 = pneg %p200
      // Predicated region
      $region9: #{tpu_custom_call.1} parent=5 // pred_check
        _
      $region10: #{tpu_custom_call.1} parent=5 // pred_check_branch
        %203 = sbr.rel (%p200) target = $region12
      $region11: #{tpu_custom_call.1} parent=5 // pred_region
        %s204 = ssub.s32 %s23, 1
        // Predicated region
        $region13: #{tpu_custom_call.1} parent=11 // pred_check
          %p205 = pneg %p70
        $region14: #{tpu_custom_call.1} parent=11 // pred_check_branch
          %207 = sbr.rel (%p205) target = $region16
        $region15: #{tpu_custom_call.1} parent=11 // pred_region
          %s209 = ssub.s32 4096, 4096
          %210 = vsyncadd [#allocation6], %s209
          %s211 = sshll.u32 [#allocation5], 4
          %s212 = int_to_ptr.vmem [resolvable:$true] %s211
          %217 = dma.hbm_to_vmem [thread:$0]  %s1, 4096, %s212, [#allocation6], 128, 128, 8
        $region16: #{tpu_custom_call.1} parent=11 // pred_fallthru
          _
        // Predicated region
        $region17: #{tpu_custom_call.1} parent=11 // pred_check
          %p218 = pneg %p91
        $region18: #{tpu_custom_call.1} parent=11 // pred_check_branch
          %220 = sbr.rel (%p218) target = $region20
        $region19: #{tpu_custom_call.1} parent=11 // pred_region
          _
        $region20: #{tpu_custom_call.1} parent=11 // pred_fallthru
          _
        // Predicated region
        $region21: #{tpu_custom_call.1} parent=11 // pred_check
          %p221 = pneg %p112
        $region22: #{tpu_custom_call.1} parent=11 // pred_check_branch
          %223 = sbr.rel (%p221) target = $region24
        $region23: #{tpu_custom_call.1} parent=11 // pred_region
          _
        $region24: #{tpu_custom_call.1} parent=11 // pred_fallthru
          _
      $region12: #{tpu_custom_call.1} parent=5 // pred_fallthru
        _
      %p224 = scmp.lt.s32.totalorder %s23, 3
      // Predicated region
      $region25: #{tpu_custom_call.1} parent=5 // pred_check
        %p225 = pneg %p224
      $region26: #{tpu_custom_call.1} parent=5 // pred_check_branch
        %227 = sbr.rel (%p225) target = $region28
      $region27: #{tpu_custom_call.1} parent=5 // pred_region
        // Predicated region
        $region29: #{tpu_custom_call.1} parent=27 // pred_check
          %p228 = pneg %p43
        $region30: #{tpu_custom_call.1} parent=27 // pred_check_branch
          %230 = sbr.rel (%p228) target = $region32
        $region31: #{tpu_custom_call.1} parent=27 // pred_region
          %s231 = sand.u32 %s33, 1
          %s232 = scalar_lea.sflag [#allocation3], %s231
          %s233 = sand.u32 %s33, 1
          %s234 = smul.addr %s233, 256
          %s235 = scalar_lea.vmem [#allocation2], %s234
          %s236 = smul.u32 32, %s23
          %s238 = ssub.s32 4096, 4096
          %239 = vsyncadd %s232, %s238
          %s240 = smul.addr %s236, 128
          %s241 = scalar_lea.hbm %s0, %s240
          %s242 = sshll.u32 %s235, 4
          %s243 = int_to_ptr.vmem [resolvable:$true] %s242
          %248 = dma.hbm_to_vmem [thread:$0]  %s241, 4096, %s243, %s232, 128, 128, 8
        $region32: #{tpu_custom_call.1} parent=27 // pred_fallthru
          _
      $region28: #{tpu_custom_call.1} parent=5 // pred_fallthru
        _
      %p249 = scmp.le.s32.totalorder 1, %s23
      %p250 = scmp.lt.s32.totalorder %s23, 4
      %p251 = pnand %p249, %p250
      %p252 = pneg %p251
      // Predicated region
      $region33: #{tpu_custom_call.1} parent=5 // pred_check
        _
      $region34: #{tpu_custom_call.1} parent=5 // pred_check_branch
        %254 = sbr.rel (%p251) target = $region36
      $region35: #{tpu_custom_call.1} parent=5 // pred_region
        %s255 = ssub.s32 %s23, 1
        %s256 = sand.u32 %s36, 1
        %s257 = scalar_lea.sflag [#allocation3], %s256
        %s258 = sand.u32 %s36, 1
        %s259 = smul.addr %s258, 256
        %s260 = scalar_lea.vmem [#allocation2], %s259
        // Predicated region
        $region37: #{tpu_custom_call.1} parent=35 // pred_check
          %p261 = pneg %p49
        $region38: #{tpu_custom_call.1} parent=35 // pred_check_branch
          %263 = sbr.rel (%p261) target = $region40
        $region39: #{tpu_custom_call.1} parent=35 // pred_region
          %264 = dma.done %s257, 4096
        $region40: #{tpu_custom_call.1} parent=35 // pred_fallthru
          _
        // Predicated region
        $region41: #{tpu_custom_call.1} parent=35 // pred_check
          %p265 = pneg %p70
        $region42: #{tpu_custom_call.1} parent=35 // pred_check_branch
          %267 = sbr.rel (%p265) target = $region44
        $region43: #{tpu_custom_call.1} parent=35 // pred_region
          %268 = dma.done [#allocation6], 4096
        $region44: #{tpu_custom_call.1} parent=35 // pred_fallthru
          _
        %s269 = sand.u32 %s36, 1
        %s270 = scalar_lea.sflag [#allocation3], %s269
        %s271 = sand.u32 %s36, 1
        %s272 = smul.addr %s271, 256
        %s273 = scalar_lea.vmem [#allocation2], %s272
        %p274 = pneg %p49
        %p275 = pneg %p46
        %p276 = pneg %p70
        %p277 = pneg %p67
        %p278 = pneg %p91
        %p279 = pneg %p88
        %p280 = pneg %p112
        %p281 = pneg %p109
        %p282 = pneg %p138
        %p283 = pneg %p135
        %s284 = sand.u32 %s125, 1
        %s285 = scalar_lea.sflag [#allocation4], %s284
        %s286 = sand.u32 %s125, 1
        %s287 = smul.addr %s286, 256
        %s288 = scalar_lea.vmem [#allocation7], %s287
        %p289 = pneg %p164
        %p290 = pneg %p161
        %s291 = sand.u32 %s28, 1
        %s292 = scalar_lea.sflag [#allocation9], %s291
        %s293 = sand.u32 %s151, 1
        %s294 = smul.addr %s293, 256
        %s295 = scalar_lea.vmem [#allocation8], %s294
        %p296 = pneg %p190
        %p297 = pneg %p187
        %s298 = sand.u32 %s28, 1
        %s299 = scalar_lea.sflag [#allocation9], %s298
        %s300 = sand.u32 %s177, 1
        %s301 = smul.addr %s300, 256
        %s302 = scalar_lea.vmem [#allocation10], %s301
        %s303 = smul.u32 32, %s28
        %s304 = smul.u32 32, %s28
        %s305 = smul.u32 32, %s28
        %s306 = smul.u32 32, %s28
        %v307 = vld [vmem:[%s260] sm:$0xff]
        %v308 = vld [vmem:[%s260 + $0x8] sm:$0xff]
        %v309 = vld [vmem:[%s260 + $0x10] sm:$0xff]
        %v310 = vld [vmem:[%s260 + $0x18] sm:$0xff]
        %v311 = vld [vmem:[%s260 + $0x20] sm:$0xff]
        %v312 = vld [vmem:[%s260 + $0x28] sm:$0xff]
        %v313 = vld [vmem:[%s260 + $0x30] sm:$0xff]
        %v314 = vld [vmem:[%s260 + $0x38] sm:$0xff]
        %v315 = vld [vmem:[%s260 + $0x40] sm:$0xff]
        %v316 = vld [vmem:[%s260 + $0x48] sm:$0xff]
        %v317 = vld [vmem:[%s260 + $0x50] sm:$0xff]
        %v318 = vld [vmem:[%s260 + $0x58] sm:$0xff]
        %v319 = vld [vmem:[%s260 + $0x60] sm:$0xff]
        %v320 = vld [vmem:[%s260 + $0x68] sm:$0xff]
        %v321 = vld [vmem:[%s260 + $0x70] sm:$0xff]
        %v322 = vld [vmem:[%s260 + $0x78] sm:$0xff]
        %v323 = vld [vmem:[%s260 + $0x80] sm:$0xff]
        %v324 = vld [vmem:[%s260 + $0x88] sm:$0xff]
        %v325 = vld [vmem:[%s260 + $0x90] sm:$0xff]
        %v326 = vld [vmem:[%s260 + $0x98] sm:$0xff]
        %v327 = vld [vmem:[%s260 + $0xa0] sm:$0xff]
        %v328 = vld [vmem:[%s260 + $0xa8] sm:$0xff]
        %v329 = vld [vmem:[%s260 + $0xb0] sm:$0xff]
        %v330 = vld [vmem:[%s260 + $0xb8] sm:$0xff]
        %v331 = vld [vmem:[%s260 + $0xc0] sm:$0xff]
        %v332 = vld [vmem:[%s260 + $0xc8] sm:$0xff]
        %v333 = vld [vmem:[%s260 + $0xd0] sm:$0xff]
        %v334 = vld [vmem:[%s260 + $0xd8] sm:$0xff]
        %v335 = vld [vmem:[%s260 + $0xe0] sm:$0xff]
        %v336 = vld [vmem:[%s260 + $0xe8] sm:$0xff]
        %v337 = vld [vmem:[%s260 + $0xf0] sm:$0xff]
        %v338 = vld [vmem:[%s260 + $0xf8] sm:$0xff]
        %v339 = vld [vmem:[#allocation5] sm:$0xff]
        %v340 = vld [vmem:[#allocation5 + $0x8] sm:$0xff]
        %v341 = vld [vmem:[#allocation5 + $0x10] sm:$0xff]
        %v342 = vld [vmem:[#allocation5 + $0x18] sm:$0xff]
        %v343 = vld [vmem:[#allocation5 + $0x20] sm:$0xff]
        %v344 = vld [vmem:[#allocation5 + $0x28] sm:$0xff]
        %v345 = vld [vmem:[#allocation5 + $0x30] sm:$0xff]
        %v346 = vld [vmem:[#allocation5 + $0x38] sm:$0xff]
        %v347 = vld [vmem:[#allocation5 + $0x40] sm:$0xff]
        %v348 = vld [vmem:[#allocation5 + $0x48] sm:$0xff]
        %v349 = vld [vmem:[#allocation5 + $0x50] sm:$0xff]
        %v350 = vld [vmem:[#allocation5 + $0x58] sm:$0xff]
        %v351 = vld [vmem:[#allocation5 + $0x60] sm:$0xff]
        %v352 = vld [vmem:[#allocation5 + $0x68] sm:$0xff]
        %v353 = vld [vmem:[#allocation5 + $0x70] sm:$0xff]
        %v354 = vld [vmem:[#allocation5 + $0x78] sm:$0xff]
        %355 = vmatprep.subr.mxu0 0.0
        %356 = vmatpush1.msra.mxu0 %v339
        %357 = vmatprep.subr.mxu0 0.0
        %358 = vmatpush1.msra.mxu0 %v340
        %359 = vmatprep.subr.mxu0 0.0
        %360 = vmatpush1.msra.mxu0 %v341
        %361 = vmatprep.subr.mxu0 0.0
        %362 = vmatpush1.msra.mxu0 %v342
        %363 = vmatprep.subr.mxu0 0.0
        %364 = vmatpush1.msra.mxu0 %v343
        %365 = vmatprep.subr.mxu0 0.0
        %366 = vmatpush1.msra.mxu0 %v344
        %367 = vmatprep.subr.mxu0 0.0
        %368 = vmatpush1.msra.mxu0 %v345
        %369 = vmatprep.subr.mxu0 0.0
        %370 = vmatpush1.msra.mxu0 %v346
        %371 = vmatprep.subr.mxu0 0.0
        %372 = vmatpush1.msra.mxu0 %v347
        %373 = vmatprep.subr.mxu0 0.0
        %374 = vmatpush1.msra.mxu0 %v348
        %375 = vmatprep.subr.mxu0 0.0
        %376 = vmatpush1.msra.mxu0 %v349
        %377 = vmatprep.subr.mxu0 0.0
        %378 = vmatpush1.msra.mxu0 %v350
        %379 = vmatprep.subr.mxu0 0.0
        %380 = vmatpush1.msra.mxu0 %v351
        %381 = vmatprep.subr.mxu0 0.0
        %382 = vmatpush1.msra.mxu0 %v352
        %383 = vmatprep.subr.mxu0 0.0
        %384 = vmatpush1.msra.mxu0 %v353
        %385 = vmatprep.subr.mxu0 0.0
        %386 = vmatpush1.msra.mxu0 %v354
        %387 = vmatprep.subr.mxu0 0.0
        %388 = vmatpush1.msra.mxu0 0.0
        %389 = vmatprep.subr.mxu0 0.0
        %390 = vmatpush1.msra.mxu0 0.0
        %391 = vmatprep.subr.mxu0 0.0
        %392 = vmatpush1.msra.mxu0 0.0
        %393 = vmatprep.subr.mxu0 0.0
        %394 = vmatpush1.msra.mxu0 0.0
        %395 = vmatprep.subr.mxu0 0.0
        %396 = vmatpush1.msra.mxu0 0.0
        %397 = vmatprep.subr.mxu0 0.0
        %398 = vmatpush1.msra.mxu0 0.0
        %399 = vmatprep.subr.mxu0 0.0
        %400 = vmatpush1.msra.mxu0 0.0
        %401 = vmatprep.subr.mxu0 0.0
        %402 = vmatpush1.msra.mxu0 0.0
        %403 = vmatprep.subr.mxu0 0.0
        %404 = vmatpush1.msra.mxu0 0.0
        %405 = vmatprep.subr.mxu0 0.0
        %406 = vmatpush1.msra.mxu0 0.0
        %407 = vmatprep.subr.mxu0 0.0
        %408 = vmatpush1.msra.mxu0 0.0
        %409 = vmatprep.subr.mxu0 0.0
        %410 = vmatpush1.msra.mxu0 0.0
        %411 = vmatprep.subr.mxu0 0.0
        %412 = vmatpush1.msra.mxu0 0.0
        %413 = vmatprep.subr.mxu0 0.0
        %414 = vmatpush1.msra.mxu0 0.0
        %415 = vmatprep.subr.mxu0 0.0
        %416 = vmatpush1.msra.mxu0 0.0
        %417 = vmatprep.subr.mxu0 0.0
        %418 = vmatpush1.msra.mxu0 0.0
        %419 = vmatprep.mubr.f32.mxu0 0.0
        %420 = vmatmul.mubr.f32.gmra.mrb[0].mxu0 %v307
        %v421 = vpop.f32.mrb[0].mxu0
        %v422 = vadd.f32 0.0, %v421
        %v423 = vpop.f32.mrb[0].mxu0
        %424 = vmatprep.mubr.f32.mxu0 0.0
        %425 = vmatmul.mubr.f32.gmra.mrb[0].mxu0 %v308
        %v426 = vpop.f32.mrb[0].mxu0
        %v427 = vadd.f32 0.0, %v426
        %v428 = vpop.f32.mrb[0].mxu0
        %429 = vmatprep.mubr.f32.mxu0 0.0
        %430 = vmatmul.mubr.f32.gmra.mrb[0].mxu0 %v309
        %v431 = vpop.f32.mrb[0].mxu0
        %v432 = vadd.f32 0.0, %v431
        %v433 = vpop.f32.mrb[0].mxu0
        %434 = vmatprep.mubr.f32.mxu0 0.0
        %435 = vmatmul.mubr.f32.gmra.mrb[0].mxu0 %v310
        %v436 = vpop.f32.mrb[0].mxu0
        %v437 = vadd.f32 0.0, %v436
        %v438 = vpop.f32.mrb[0].mxu0
        %439 = vmatprep.mubr.f32.mxu0 0.0
        %440 = vmatmul.mubr.f32.gmra.mrb[0].mxu0 %v311
        %v441 = vpop.f32.mrb[0].mxu0
        %v442 = vadd.f32 0.0, %v441
        %v443 = vpop.f32.mrb[0].mxu0
        %444 = vmatprep.mubr.f32.mxu0 0.0
        %445 = vmatmul.mubr.f32.gmra.mrb[0].mxu0 %v312
        %v446 = vpop.f32.mrb[0].mxu0
        %v447 = vadd.f32 0.0, %v446
        %v448 = vpop.f32.mrb[0].mxu0
        %449 = vmatprep.mubr.f32.mxu0 0.0
        %450 = vmatmul.mubr.f32.gmra.mrb[0].mxu0 %v313
        %v451 = vpop.f32.mrb[0].mxu0
        %v452 = vadd.f32 0.0, %v451
        %v453 = vpop.f32.mrb[0].mxu0
        %454 = vmatprep.mubr.f32.mxu0 0.0
        %455 = vmatmul.mubr.f32.gmra.mrb[0].mxu0 %v314
        %v456 = vpop.f32.mrb[0].mxu0
        %v457 = vadd.f32 0.0, %v456
        %v458 = vpop.f32.mrb[0].mxu0
        %459 = vmatprep.mubr.f32.mxu0 0.0
        %460 = vmatmul.mubr.f32.gmra.mrb[0].mxu0 %v315
        %v461 = vpop.f32.mrb[0].mxu0
        %v462 = vadd.f32 0.0, %v461
        %v463 = vpop.f32.mrb[0].mxu0
        %464 = vmatprep.mubr.f32.mxu0 0.0
        %465 = vmatmul.mubr.f32.gmra.mrb[0].mxu0 %v316
        %v466 = vpop.f32.mrb[0].mxu0
        %v467 = vadd.f32 0.0, %v466
        %v468 = vpop.f32.mrb[0].mxu0
        %469 = vmatprep.mubr.f32.mxu0 0.0
        %470 = vmatmul.mubr.f32.gmra.mrb[0].mxu0 %v317
        %v471 = vpop.f32.mrb[0].mxu0
        %v472 = vadd.f32 0.0, %v471
        %v473 = vpop.f32.mrb[0].mxu0
        %474 = vmatprep.mubr.f32.mxu0 0.0
        %475 = vmatmul.mubr.f32.gmra.mrb[0].mxu0 %v318
        %v476 = vpop.f32.mrb[0].mxu0
        %v477 = vadd.f32 0.0, %v476
        %v478 = vpop.f32.mrb[0].mxu0
        %479 = vmatprep.mubr.f32.mxu0 0.0
        %480 = vmatmul.mubr.f32.gmra.mrb[0].mxu0 %v319
        %v481 = vpop.f32.mrb[0].mxu0
        %v482 = vadd.f32 0.0, %v481
        %v483 = vpop.f32.mrb[0].mxu0
        %484 = vmatprep.mubr.f32.mxu0 0.0
        %485 = vmatmul.mubr.f32.gmra.mrb[0].mxu0 %v320
        %v486 = vpop.f32.mrb[0].mxu0
        %v487 = vadd.f32 0.0, %v486
        %v488 = vpop.f32.mrb[0].mxu0
        %489 = vmatprep.mubr.f32.mxu0 0.0
        %490 = vmatmul.mubr.f32.gmra.mrb[0].mxu0 %v321
        %v491 = vpop.f32.mrb[0].mxu0
        %v492 = vadd.f32 0.0, %v491
        %v493 = vpop.f32.mrb[0].mxu0
        %494 = vmatprep.mubr.f32.mxu0 0.0
        %495 = vmatmul.mubr.f32.gmra.mrb[0].mxu0 %v322
        %v496 = vpop.f32.mrb[0].mxu0
        %v497 = vadd.f32 0.0, %v496
        %v498 = vpop.f32.mrb[0].mxu0
        %499 = vmatprep.mubr.f32.mxu0 0.0
        %500 = vmatmul.mubr.f32.gmra.mrb[0].mxu0 %v323
        %v501 = vpop.f32.mrb[0].mxu0
        %v502 = vadd.f32 0.0, %v501
        %v503 = vpop.f32.mrb[0].mxu0
        %504 = vmatprep.mubr.f32.mxu0 0.0
        %505 = vmatmul.mubr.f32.gmra.mrb[0].mxu0 %v324
        %v506 = vpop.f32.mrb[0].mxu0
        %v507 = vadd.f32 0.0, %v506
        %v508 = vpop.f32.mrb[0].mxu0
        %509 = vmatprep.mubr.f32.mxu0 0.0
        %510 = vmatmul.mubr.f32.gmra.mrb[0].mxu0 %v325
        %v511 = vpop.f32.mrb[0].mxu0
        %v512 = vadd.f32 0.0, %v511
        %v513 = vpop.f32.mrb[0].mxu0
        %514 = vmatprep.mubr.f32.mxu0 0.0
        %515 = vmatmul.mubr.f32.gmra.mrb[0].mxu0 %v326
        %v516 = vpop.f32.mrb[0].mxu0
        %v517 = vadd.f32 0.0, %v516
        %v518 = vpop.f32.mrb[0].mxu0
        %519 = vmatprep.mubr.f32.mxu0 0.0
        %520 = vmatmul.mubr.f32.gmra.mrb[0].mxu0 %v327
        %v521 = vpop.f32.mrb[0].mxu0
        %v522 = vadd.f32 0.0, %v521
        %v523 = vpop.f32.mrb[0].mxu0
        %524 = vmatprep.mubr.f32.mxu0 0.0
        %525 = vmatmul.mubr.f32.gmra.mrb[0].mxu0 %v328
        %v526 = vpop.f32.mrb[0].mxu0
        %v527 = vadd.f32 0.0, %v526
        %v528 = vpop.f32.mrb[0].mxu0
        %529 = vmatprep.mubr.f32.mxu0 0.0
        %530 = vmatmul.mubr.f32.gmra.mrb[0].mxu0 %v329
        %v531 = vpop.f32.mrb[0].mxu0
        %v532 = vadd.f32 0.0, %v531
        %v533 = vpop.f32.mrb[0].mxu0
        %534 = vmatprep.mubr.f32.mxu0 0.0
        %535 = vmatmul.mubr.f32.gmra.mrb[0].mxu0 %v330
        %v536 = vpop.f32.mrb[0].mxu0
        %v537 = vadd.f32 0.0, %v536
        %v538 = vpop.f32.mrb[0].mxu0
        %539 = vmatprep.mubr.f32.mxu0 0.0
        %540 = vmatmul.mubr.f32.gmra.mrb[0].mxu0 %v331
        %v541 = vpop.f32.mrb[0].mxu0
        %v542 = vadd.f32 0.0, %v541
        %v543 = vpop.f32.mrb[0].mxu0
        %544 = vmatprep.mubr.f32.mxu0 0.0
        %545 = vmatmul.mubr.f32.gmra.mrb[0].mxu0 %v332
        %v546 = vpop.f32.mrb[0].mxu0
        %v547 = vadd.f32 0.0, %v546
        %v548 = vpop.f32.mrb[0].mxu0
        %549 = vmatprep.mubr.f32.mxu0 0.0
        %550 = vmatmul.mubr.f32.gmra.mrb[0].mxu0 %v333
        %v551 = vpop.f32.mrb[0].mxu0
        %v552 = vadd.f32 0.0, %v551
        %v553 = vpop.f32.mrb[0].mxu0
        %554 = vmatprep.mubr.f32.mxu0 0.0
        %555 = vmatmul.mubr.f32.gmra.mrb[0].mxu0 %v334
        %v556 = vpop.f32.mrb[0].mxu0
        %v557 = vadd.f32 0.0, %v556
        %v558 = vpop.f32.mrb[0].mxu0
        %559 = vmatprep.mubr.f32.mxu0 0.0
        %560 = vmatmul.mubr.f32.gmra.mrb[0].mxu0 %v335
        %v561 = vpop.f32.mrb[0].mxu0
        %v562 = vadd.f32 0.0, %v561
        %v563 = vpop.f32.mrb[0].mxu0
        %564 = vmatprep.mubr.f32.mxu0 0.0
        %565 = vmatmul.mubr.f32.gmra.mrb[0].mxu0 %v336
        %v566 = vpop.f32.mrb[0].mxu0
        %v567 = vadd.f32 0.0, %v566
        %v568 = vpop.f32.mrb[0].mxu0
        %569 = vmatprep.mubr.f32.mxu0 0.0
        %570 = vmatmul.mubr.f32.gmra.mrb[0].mxu0 %v337
        %v571 = vpop.f32.mrb[0].mxu0
        %v572 = vadd.f32 0.0, %v571
        %v573 = vpop.f32.mrb[0].mxu0
        %574 = vmatprep.mubr.f32.mxu0 0.0
        %575 = vmatmul.mubr.f32.gmra.mrb[0].mxu0 %v338
        %v576 = vpop.f32.mrb[0].mxu0
        %v577 = vadd.f32 0.0, %v576
        %v578 = vpop.f32.mrb[0].mxu0
        %579 = vdwg.mxu0
        %v580 = vpack.c.bf16 %v427, %v422
        %v581 = vpack.c.bf16 %v437, %v432
        %v582 = vpack.c.bf16 %v447, %v442
        %v583 = vpack.c.bf16 %v457, %v452
        %v584 = vpack.c.bf16 %v467, %v462
        %v585 = vpack.c.bf16 %v477, %v472
        %v586 = vpack.c.bf16 %v487, %v482
        %v587 = vpack.c.bf16 %v497, %v492
        %v588 = vpack.c.bf16 %v507, %v502
        %v589 = vpack.c.bf16 %v517, %v512
        %v590 = vpack.c.bf16 %v527, %v522
        %v591 = vpack.c.bf16 %v537, %v532
        %v592 = vpack.c.bf16 %v547, %v542
        %v593 = vpack.c.bf16 %v557, %v552
        %v594 = vpack.c.bf16 %v567, %v562
        %v595 = vpack.c.bf16 %v577, %v572
        %v612 = vunpack.c.l.b16 %v580
        %v613 = vunpack.c.h.b16 %v580
        %v614 = vunpack.c.l.b16 %v581
        %v615 = vunpack.c.h.b16 %v581
        %v616 = vunpack.c.l.b16 %v582
        %v617 = vunpack.c.h.b16 %v582
        %v618 = vunpack.c.l.b16 %v583
        %v619 = vunpack.c.h.b16 %v583
        %v620 = vunpack.c.l.b16 %v584
        %v621 = vunpack.c.h.b16 %v584
        %v622 = vunpack.c.l.b16 %v585
        %v623 = vunpack.c.h.b16 %v585
        %v624 = vunpack.c.l.b16 %v586
        %v625 = vunpack.c.h.b16 %v586
        %v626 = vunpack.c.l.b16 %v587
        %v627 = vunpack.c.h.b16 %v587
        %v628 = vunpack.c.l.b16 %v588
        %v629 = vunpack.c.h.b16 %v588
        %v630 = vunpack.c.l.b16 %v589
        %v631 = vunpack.c.h.b16 %v589
        %v632 = vunpack.c.l.b16 %v590
        %v633 = vunpack.c.h.b16 %v590
        %v634 = vunpack.c.l.b16 %v591
        %v635 = vunpack.c.h.b16 %v591
        %v636 = vunpack.c.l.b16 %v592
        %v637 = vunpack.c.h.b16 %v592
        %v638 = vunpack.c.l.b16 %v593
        %v639 = vunpack.c.h.b16 %v593
        %v640 = vunpack.c.l.b16 %v594
        %v641 = vunpack.c.h.b16 %v594
        %v642 = vunpack.c.l.b16 %v595
        %v643 = vunpack.c.h.b16 %v595
        %v644 = vpack.c.b16 %v612, %v612
        %v645 = vpack.c.b16 %v613, %v613
        %v646 = vpack.c.b16 %v614, %v614
        %v647 = vpack.c.b16 %v615, %v615
        %v648 = vpack.c.b16 %v616, %v616
        %v649 = vpack.c.b16 %v617, %v617
        %v650 = vpack.c.b16 %v618, %v618
        %v651 = vpack.c.b16 %v619, %v619
        %v652 = vpack.c.b16 %v620, %v620
        %v653 = vpack.c.b16 %v621, %v621
        %v654 = vpack.c.b16 %v622, %v622
        %v655 = vpack.c.b16 %v623, %v623
        %v656 = vpack.c.b16 %v624, %v624
        %v657 = vpack.c.b16 %v625, %v625
        %v658 = vpack.c.b16 %v626, %v626
        %v659 = vpack.c.b16 %v627, %v627
        %v660 = vpack.c.b16 %v628, %v628
        %v661 = vpack.c.b16 %v629, %v629
        %v662 = vpack.c.b16 %v630, %v630
        %v663 = vpack.c.b16 %v631, %v631
        %v664 = vpack.c.b16 %v632, %v632
        %v665 = vpack.c.b16 %v633, %v633
        %v666 = vpack.c.b16 %v634, %v634
        %v667 = vpack.c.b16 %v635, %v635
        %v668 = vpack.c.b16 %v636, %v636
        %v669 = vpack.c.b16 %v637, %v637
        %v670 = vpack.c.b16 %v638, %v638
        %v671 = vpack.c.b16 %v639, %v639
        %v672 = vpack.c.b16 %v640, %v640
        %v673 = vpack.c.b16 %v641, %v641
        %v674 = vpack.c.b16 %v642, %v642
        %v675 = vpack.c.b16 %v643, %v643
        %708 = vst [vmem:[%s288] sm:$0xf] %v644
        %709 = vst [vmem:[%s288 + $0x4] sm:$0xf] %v645
        %710 = vst [vmem:[%s288 + $0x8] sm:$0xf] %v646
        %711 = vst [vmem:[%s288 + $0xc] sm:$0xf] %v647
        %712 = vst [vmem:[%s288 + $0x10] sm:$0xf] %v648
        %713 = vst [vmem:[%s288 + $0x14] sm:$0xf] %v649
        %714 = vst [vmem:[%s288 + $0x18] sm:$0xf] %v650
        %715 = vst [vmem:[%s288 + $0x1c] sm:$0xf] %v651
        %716 = vst [vmem:[%s288 + $0x20] sm:$0xf] %v652
        %717 = vst [vmem:[%s288 + $0x24] sm:$0xf] %v653
        %718 = vst [vmem:[%s288 + $0x28] sm:$0xf] %v654
        %719 = vst [vmem:[%s288 + $0x2c] sm:$0xf] %v655
        %720 = vst [vmem:[%s288 + $0x30] sm:$0xf] %v656
        %721 = vst [vmem:[%s288 + $0x34] sm:$0xf] %v657
        %722 = vst [vmem:[%s288 + $0x38] sm:$0xf] %v658
        %723 = vst [vmem:[%s288 + $0x3c] sm:$0xf] %v659
        %724 = vst [vmem:[%s288 + $0x40] sm:$0xf] %v660
        %725 = vst [vmem:[%s288 + $0x44] sm:$0xf] %v661
        %726 = vst [vmem:[%s288 + $0x48] sm:$0xf] %v662
        %727 = vst [vmem:[%s288 + $0x4c] sm:$0xf] %v663
        %728 = vst [vmem:[%s288 + $0x50] sm:$0xf] %v664
        %729 = vst [vmem:[%s288 + $0x54] sm:$0xf] %v665
        %730 = vst [vmem:[%s288 + $0x58] sm:$0xf] %v666
        %731 = vst [vmem:[%s288 + $0x5c] sm:$0xf] %v667
        %732 = vst [vmem:[%s288 + $0x60] sm:$0xf] %v668
        %733 = vst [vmem:[%s288 + $0x64] sm:$0xf] %v669
        %734 = vst [vmem:[%s288 + $0x68] sm:$0xf] %v670
        %735 = vst [vmem:[%s288 + $0x6c] sm:$0xf] %v671
        %736 = vst [vmem:[%s288 + $0x70] sm:$0xf] %v672
        %737 = vst [vmem:[%s288 + $0x74] sm:$0xf] %v673
        %738 = vst [vmem:[%s288 + $0x78] sm:$0xf] %v674
        %739 = vst [vmem:[%s288 + $0x7c] sm:$0xf] %v675
        %v740 = vld [vmem:[%s2] sm:$0x1]
        %v742 = vlaneseq
        %v743 = vshrl.u32 %v742, 7
        %v744 = vsub.s32 0, %v743
        %v745 = vrot.slane %v740, %v744
        %v747 = vmul.f32 %v422, %v745
        %v748 = vmul.f32 %v427, %v745
        %v749 = vmul.f32 %v432, %v745
        %v750 = vmul.f32 %v437, %v745
        %v751 = vmul.f32 %v442, %v745
        %v752 = vmul.f32 %v447, %v745
        %v753 = vmul.f32 %v452, %v745
        %v754 = vmul.f32 %v457, %v745
        %v755 = vmul.f32 %v462, %v745
        %v756 = vmul.f32 %v467, %v745
        %v757 = vmul.f32 %v472, %v745
        %v758 = vmul.f32 %v477, %v745
        %v759 = vmul.f32 %v482, %v745
        %v760 = vmul.f32 %v487, %v745
        %v761 = vmul.f32 %v492, %v745
        %v762 = vmul.f32 %v497, %v745
        %v763 = vmul.f32 %v502, %v745
        %v764 = vmul.f32 %v507, %v745
        %v765 = vmul.f32 %v512, %v745
        %v766 = vmul.f32 %v517, %v745
        %v767 = vmul.f32 %v522, %v745
        %v768 = vmul.f32 %v527, %v745
        %v769 = vmul.f32 %v532, %v745
        %v770 = vmul.f32 %v537, %v745
        %v771 = vmul.f32 %v542, %v745
        %v772 = vmul.f32 %v547, %v745
        %v773 = vmul.f32 %v552, %v745
        %v774 = vmul.f32 %v557, %v745
        %v775 = vmul.f32 %v562, %v745
        %v776 = vmul.f32 %v567, %v745
        %v777 = vmul.f32 %v572, %v745
        %v778 = vmul.f32 %v577, %v745
        %779 = vadd.xlane.f32.xlu0 %v747
        %v780 = vpop.xlane.xlu0 %779
        %781 = vadd.xlane.f32.xlu0 %v748
        %v782 = vpop.xlane.xlu0 %781
        %783 = vadd.xlane.f32.xlu0 %v749
        %v784 = vpop.xlane.xlu0 %783
        %785 = vadd.xlane.f32.xlu0 %v750
        %v786 = vpop.xlane.xlu0 %785
        %787 = vadd.xlane.f32.xlu0 %v751
        %v788 = vpop.xlane.xlu0 %787
        %789 = vadd.xlane.f32.xlu0 %v752
        %v790 = vpop.xlane.xlu0 %789
        %791 = vadd.xlane.f32.xlu0 %v753
        %v792 = vpop.xlane.xlu0 %791
        %793 = vadd.xlane.f32.xlu0 %v754
        %v794 = vpop.xlane.xlu0 %793
        %795 = vadd.xlane.f32.xlu0 %v755
        %v796 = vpop.xlane.xlu0 %795
        %797 = vadd.xlane.f32.xlu0 %v756
        %v798 = vpop.xlane.xlu0 %797
        %799 = vadd.xlane.f32.xlu0 %v757
        %v800 = vpop.xlane.xlu0 %799
        %801 = vadd.xlane.f32.xlu0 %v758
        %v802 = vpop.xlane.xlu0 %801
        %803 = vadd.xlane.f32.xlu0 %v759
        %v804 = vpop.xlane.xlu0 %803
        %805 = vadd.xlane.f32.xlu0 %v760
        %v806 = vpop.xlane.xlu0 %805
        %807 = vadd.xlane.f32.xlu0 %v761
        %v808 = vpop.xlane.xlu0 %807
        %809 = vadd.xlane.f32.xlu0 %v762
        %v810 = vpop.xlane.xlu0 %809
        %811 = vadd.xlane.f32.xlu0 %v763
        %v812 = vpop.xlane.xlu0 %811
        %813 = vadd.xlane.f32.xlu0 %v764
        %v814 = vpop.xlane.xlu0 %813
        %815 = vadd.xlane.f32.xlu0 %v765
        %v816 = vpop.xlane.xlu0 %815
        %817 = vadd.xlane.f32.xlu0 %v766
        %v818 = vpop.xlane.xlu0 %817
        %819 = vadd.xlane.f32.xlu0 %v767
        %v820 = vpop.xlane.xlu0 %819
        %821 = vadd.xlane.f32.xlu0 %v768
        %v822 = vpop.xlane.xlu0 %821
        %823 = vadd.xlane.f32.xlu0 %v769
        %v824 = vpop.xlane.xlu0 %823
        %825 = vadd.xlane.f32.xlu0 %v770
        %v826 = vpop.xlane.xlu0 %825
        %827 = vadd.xlane.f32.xlu0 %v771
        %v828 = vpop.xlane.xlu0 %827
        %829 = vadd.xlane.f32.xlu0 %v772
        %v830 = vpop.xlane.xlu0 %829
        %831 = vadd.xlane.f32.xlu0 %v773
        %v832 = vpop.xlane.xlu0 %831
        %833 = vadd.xlane.f32.xlu0 %v774
        %v834 = vpop.xlane.xlu0 %833
        %835 = vadd.xlane.f32.xlu0 %v775
        %v836 = vpop.xlane.xlu0 %835
        %837 = vadd.xlane.f32.xlu0 %v776
        %v838 = vpop.xlane.xlu0 %837
        %839 = vadd.xlane.f32.xlu0 %v777
        %v840 = vpop.xlane.xlu0 %839
        %841 = vadd.xlane.f32.xlu0 %v778
        %v842 = vpop.xlane.xlu0 %841
        %v843 = vld [vmem:[%s3] sm:$0x1]
        %v845 = vlaneseq
        %v846 = vshrl.u32 %v845, 7
        %v847 = vsub.s32 0, %v846
        %v848 = vrot.slane %v843, %v847
        %v850 = vmul.f32 %v422, %v848
        %v851 = vmul.f32 %v427, %v848
        %v852 = vmul.f32 %v432, %v848
        %v853 = vmul.f32 %v437, %v848
        %v854 = vmul.f32 %v442, %v848
        %v855 = vmul.f32 %v447, %v848
        %v856 = vmul.f32 %v452, %v848
        %v857 = vmul.f32 %v457, %v848
        %v858 = vmul.f32 %v462, %v848
        %v859 = vmul.f32 %v467, %v848
        %v860 = vmul.f32 %v472, %v848
        %v861 = vmul.f32 %v477, %v848
        %v862 = vmul.f32 %v482, %v848
        %v863 = vmul.f32 %v487, %v848
        %v864 = vmul.f32 %v492, %v848
        %v865 = vmul.f32 %v497, %v848
        %v866 = vmul.f32 %v502, %v848
        %v867 = vmul.f32 %v507, %v848
        %v868 = vmul.f32 %v512, %v848
        %v869 = vmul.f32 %v517, %v848
        %v870 = vmul.f32 %v522, %v848
        %v871 = vmul.f32 %v527, %v848
        %v872 = vmul.f32 %v532, %v848
        %v873 = vmul.f32 %v537, %v848
        %v874 = vmul.f32 %v542, %v848
        %v875 = vmul.f32 %v547, %v848
        %v876 = vmul.f32 %v552, %v848
        %v877 = vmul.f32 %v557, %v848
        %v878 = vmul.f32 %v562, %v848
        %v879 = vmul.f32 %v567, %v848
        %v880 = vmul.f32 %v572, %v848
        %v881 = vmul.f32 %v577, %v848
        %882 = vadd.xlane.f32.xlu0 %v850
        %v883 = vpop.xlane.xlu0 %882
        %884 = vadd.xlane.f32.xlu0 %v851
        %v885 = vpop.xlane.xlu0 %884
        %886 = vadd.xlane.f32.xlu0 %v852
        %v887 = vpop.xlane.xlu0 %886
        %888 = vadd.xlane.f32.xlu0 %v853
        %v889 = vpop.xlane.xlu0 %888
        %890 = vadd.xlane.f32.xlu0 %v854
        %v891 = vpop.xlane.xlu0 %890
        %892 = vadd.xlane.f32.xlu0 %v855
        %v893 = vpop.xlane.xlu0 %892
        %894 = vadd.xlane.f32.xlu0 %v856
        %v895 = vpop.xlane.xlu0 %894
        %896 = vadd.xlane.f32.xlu0 %v857
        %v897 = vpop.xlane.xlu0 %896
        %898 = vadd.xlane.f32.xlu0 %v858
        %v899 = vpop.xlane.xlu0 %898
        %900 = vadd.xlane.f32.xlu0 %v859
        %v901 = vpop.xlane.xlu0 %900
        %902 = vadd.xlane.f32.xlu0 %v860
        %v903 = vpop.xlane.xlu0 %902
        %904 = vadd.xlane.f32.xlu0 %v861
        %v905 = vpop.xlane.xlu0 %904
        %906 = vadd.xlane.f32.xlu0 %v862
        %v907 = vpop.xlane.xlu0 %906
        %908 = vadd.xlane.f32.xlu0 %v863
        %v909 = vpop.xlane.xlu0 %908
        %910 = vadd.xlane.f32.xlu0 %v864
        %v911 = vpop.xlane.xlu0 %910
        %912 = vadd.xlane.f32.xlu0 %v865
        %v913 = vpop.xlane.xlu0 %912
        %914 = vadd.xlane.f32.xlu0 %v866
        %v915 = vpop.xlane.xlu0 %914
        %916 = vadd.xlane.f32.xlu0 %v867
        %v917 = vpop.xlane.xlu0 %916
        %918 = vadd.xlane.f32.xlu0 %v868
        %v919 = vpop.xlane.xlu0 %918
        %920 = vadd.xlane.f32.xlu0 %v869
        %v921 = vpop.xlane.xlu0 %920
        %922 = vadd.xlane.f32.xlu0 %v870
        %v923 = vpop.xlane.xlu0 %922
        %924 = vadd.xlane.f32.xlu0 %v871
        %v925 = vpop.xlane.xlu0 %924
        %926 = vadd.xlane.f32.xlu0 %v872
        %v927 = vpop.xlane.xlu0 %926
        %928 = vadd.xlane.f32.xlu0 %v873
        %v929 = vpop.xlane.xlu0 %928
        %930 = vadd.xlane.f32.xlu0 %v874
        %v931 = vpop.xlane.xlu0 %930
        %932 = vadd.xlane.f32.xlu0 %v875
        %v933 = vpop.xlane.xlu0 %932
        %934 = vadd.xlane.f32.xlu0 %v876
        %v935 = vpop.xlane.xlu0 %934
        %936 = vadd.xlane.f32.xlu0 %v877
        %v937 = vpop.xlane.xlu0 %936
        %938 = vadd.xlane.f32.xlu0 %v878
        %v939 = vpop.xlane.xlu0 %938
        %940 = vadd.xlane.f32.xlu0 %v879
        %v941 = vpop.xlane.xlu0 %940
        %942 = vadd.xlane.f32.xlu0 %v880
        %v943 = vpop.xlane.xlu0 %942
        %944 = vadd.xlane.f32.xlu0 %v881
        %v945 = vpop.xlane.xlu0 %944
        %s946 = scalar_lea.vmem [#allocation5], 128
        %v947 = vld [vmem:[%s946] sm:$0xff]
        %v948 = vld [vmem:[%s946 + $0x8] sm:$0xff]
        %v949 = vld [vmem:[%s946 + $0x10] sm:$0xff]
        %v950 = vld [vmem:[%s946 + $0x18] sm:$0xff]
        %v951 = vld [vmem:[%s946 + $0x20] sm:$0xff]
        %v952 = vld [vmem:[%s946 + $0x28] sm:$0xff]
        %v953 = vld [vmem:[%s946 + $0x30] sm:$0xff]
        %v954 = vld [vmem:[%s946 + $0x38] sm:$0xff]
        %v955 = vld [vmem:[%s946 + $0x40] sm:$0xff]
        %v956 = vld [vmem:[%s946 + $0x48] sm:$0xff]
        %v957 = vld [vmem:[%s946 + $0x50] sm:$0xff]
        %v958 = vld [vmem:[%s946 + $0x58] sm:$0xff]
        %v959 = vld [vmem:[%s946 + $0x60] sm:$0xff]
        %v960 = vld [vmem:[%s946 + $0x68] sm:$0xff]
        %v961 = vld [vmem:[%s946 + $0x70] sm:$0xff]
        %v962 = vld [vmem:[%s946 + $0x78] sm:$0xff]
        %963 = vmatprep.subr.mxu0 0.0
        %964 = vmatpush1.msra.mxu0 %v947
        %965 = vmatprep.subr.mxu0 0.0
        %966 = vmatpush1.msra.mxu0 %v948
        %967 = vmatprep.subr.mxu0 0.0
        %968 = vmatpush1.msra.mxu0 %v949
        %969 = vmatprep.subr.mxu0 0.0
        %970 = vmatpush1.msra.mxu0 %v950
        %971 = vmatprep.subr.mxu0 0.0
        %972 = vmatpush1.msra.mxu0 %v951
        %973 = vmatprep.subr.mxu0 0.0
        %974 = vmatpush1.msra.mxu0 %v952
        %975 = vmatprep.subr.mxu0 0.0
        %976 = vmatpush1.msra.mxu0 %v953
        %977 = vmatprep.subr.mxu0 0.0
        %978 = vmatpush1.msra.mxu0 %v954
        %979 = vmatprep.subr.mxu0 0.0
        %980 = vmatpush1.msra.mxu0 %v955
        %981 = vmatprep.subr.mxu0 0.0
        %982 = vmatpush1.msra.mxu0 %v956
        %983 = vmatprep.subr.mxu0 0.0
        %984 = vmatpush1.msra.mxu0 %v957
        %985 = vmatprep.subr.mxu0 0.0
        %986 = vmatpush1.msra.mxu0 %v958
        %987 = vmatprep.subr.mxu0 0.0
        %988 = vmatpush1.msra.mxu0 %v959
        %989 = vmatprep.subr.mxu0 0.0
        %990 = vmatpush1.msra.mxu0 %v960
        %991 = vmatprep.subr.mxu0 0.0
        %992 = vmatpush1.msra.mxu0 %v961
        %993 = vmatprep.subr.mxu0 0.0
        %994 = vmatpush1.msra.mxu0 %v962
        %995 = vmatprep.subr.mxu0 0.0
        %996 = vmatpush1.msra.mxu0 0.0
        %997 = vmatprep.subr.mxu0 0.0
        %998 = vmatpush1.msra.mxu0 0.0
        %999 = vmatprep.subr.mxu0 0.0
        %1000 = vmatpush1.msra.mxu0 0.0
        %1001 = vmatprep.subr.mxu0 0.0
        %1002 = vmatpush1.msra.mxu0 0.0
        %1003 = vmatprep.subr.mxu0 0.0
        %1004 = vmatpush1.msra.mxu0 0.0
        %1005 = vmatprep.subr.mxu0 0.0
        %1006 = vmatpush1.msra.mxu0 0.0
        %1007 = vmatprep.subr.mxu0 0.0
        %1008 = vmatpush1.msra.mxu0 0.0
        %1009 = vmatprep.subr.mxu0 0.0
        %1010 = vmatpush1.msra.mxu0 0.0
        %1011 = vmatprep.subr.mxu0 0.0
        %1012 = vmatpush1.msra.mxu0 0.0
        %1013 = vmatprep.subr.mxu0 0.0
        %1014 = vmatpush1.msra.mxu0 0.0
        %1015 = vmatprep.subr.mxu0 0.0
        %1016 = vmatpush1.msra.mxu0 0.0
        %1017 = vmatprep.subr.mxu0 0.0
        %1018 = vmatpush1.msra.mxu0 0.0
        %1019 = vmatprep.subr.mxu0 0.0
        %1020 = vmatpush1.msra.mxu0 0.0
        %1021 = vmatprep.subr.mxu0 0.0
        %1022 = vmatpush1.msra.mxu0 0.0
        %1023 = vmatprep.subr.mxu0 0.0
        %1024 = vmatpush1.msra.mxu0 0.0
        %1025 = vmatprep.subr.mxu0 0.0
        %1026 = vmatpush1.msra.mxu0 0.0
        %1027 = vmatprep.mubr.f32.mxu0 0.0
        %1028 = vmatmul.mubr.f32.gmra.mrb[0].mxu0 %v307
        %v1029 = vpop.f32.mrb[0].mxu0
        %v1030 = vadd.f32 0.0, %v1029
        %v1031 = vpop.f32.mrb[0].mxu0
        %1032 = vmatprep.mubr.f32.mxu0 0.0
        %1033 = vmatmul.mubr.f32.gmra.mrb[0].mxu0 %v308
        %v1034 = vpop.f32.mrb[0].mxu0
        %v1035 = vadd.f32 0.0, %v1034
        %v1036 = vpop.f32.mrb[0].mxu0
        %1037 = vmatprep.mubr.f32.mxu0 0.0
        %1038 = vmatmul.mubr.f32.gmra.mrb[0].mxu0 %v309
        %v1039 = vpop.f32.mrb[0].mxu0
        %v1040 = vadd.f32 0.0, %v1039
        %v1041 = vpop.f32.mrb[0].mxu0
        %1042 = vmatprep.mubr.f32.mxu0 0.0
        %1043 = vmatmul.mubr.f32.gmra.mrb[0].mxu0 %v310
        %v1044 = vpop.f32.mrb[0].mxu0
        %v1045 = vadd.f32 0.0, %v1044
        %v1046 = vpop.f32.mrb[0].mxu0
        %1047 = vmatprep.mubr.f32.mxu0 0.0
        %1048 = vmatmul.mubr.f32.gmra.mrb[0].mxu0 %v311
        %v1049 = vpop.f32.mrb[0].mxu0
        %v1050 = vadd.f32 0.0, %v1049
        %v1051 = vpop.f32.mrb[0].mxu0
        %1052 = vmatprep.mubr.f32.mxu0 0.0
        %1053 = vmatmul.mubr.f32.gmra.mrb[0].mxu0 %v312
        %v1054 = vpop.f32.mrb[0].mxu0
        %v1055 = vadd.f32 0.0, %v1054
        %v1056 = vpop.f32.mrb[0].mxu0
        %1057 = vmatprep.mubr.f32.mxu0 0.0
        %1058 = vmatmul.mubr.f32.gmra.mrb[0].mxu0 %v313
        %v1059 = vpop.f32.mrb[0].mxu0
        %v1060 = vadd.f32 0.0, %v1059
        %v1061 = vpop.f32.mrb[0].mxu0
        %1062 = vmatprep.mubr.f32.mxu0 0.0
        %1063 = vmatmul.mubr.f32.gmra.mrb[0].mxu0 %v314
        %v1064 = vpop.f32.mrb[0].mxu0
        %v1065 = vadd.f32 0.0, %v1064
        %v1066 = vpop.f32.mrb[0].mxu0
        %1067 = vmatprep.mubr.f32.mxu0 0.0
        %1068 = vmatmul.mubr.f32.gmra.mrb[0].mxu0 %v315
        %v1069 = vpop.f32.mrb[0].mxu0
        %v1070 = vadd.f32 0.0, %v1069
        %v1071 = vpop.f32.mrb[0].mxu0
        %1072 = vmatprep.mubr.f32.mxu0 0.0
        %1073 = vmatmul.mubr.f32.gmra.mrb[0].mxu0 %v316
        %v1074 = vpop.f32.mrb[0].mxu0
        %v1075 = vadd.f32 0.0, %v1074
        %v1076 = vpop.f32.mrb[0].mxu0
        %1077 = vmatprep.mubr.f32.mxu0 0.0
        %1078 = vmatmul.mubr.f32.gmra.mrb[0].mxu0 %v317
        %v1079 = vpop.f32.mrb[0].mxu0
        %v1080 = vadd.f32 0.0, %v1079
        %v1081 = vpop.f32.mrb[0].mxu0
        %1082 = vmatprep.mubr.f32.mxu0 0.0
        %1083 = vmatmul.mubr.f32.gmra.mrb[0].mxu0 %v318
        %v1084 = vpop.f32.mrb[0].mxu0
        %v1085 = vadd.f32 0.0, %v1084
        %v1086 = vpop.f32.mrb[0].mxu0
        %1087 = vmatprep.mubr.f32.mxu0 0.0
        %1088 = vmatmul.mubr.f32.gmra.mrb[0].mxu0 %v319
        %v1089 = vpop.f32.mrb[0].mxu0
        %v1090 = vadd.f32 0.0, %v1089
        %v1091 = vpop.f32.mrb[0].mxu0
        %1092 = vmatprep.mubr.f32.mxu0 0.0
        %1093 = vmatmul.mubr.f32.gmra.mrb[0].mxu0 %v320
        %v1094 = vpop.f32.mrb[0].mxu0
        %v1095 = vadd.f32 0.0, %v1094
        %v1096 = vpop.f32.mrb[0].mxu0
        %1097 = vmatprep.mubr.f32.mxu0 0.0
        %1098 = vmatmul.mubr.f32.gmra.mrb[0].mxu0 %v321
        %v1099 = vpop.f32.mrb[0].mxu0
        %v1100 = vadd.f32 0.0, %v1099
        %v1101 = vpop.f32.mrb[0].mxu0
        %1102 = vmatprep.mubr.f32.mxu0 0.0
        %1103 = vmatmul.mubr.f32.gmra.mrb[0].mxu0 %v322
        %v1104 = vpop.f32.mrb[0].mxu0
        %v1105 = vadd.f32 0.0, %v1104
        %v1106 = vpop.f32.mrb[0].mxu0
        %1107 = vmatprep.mubr.f32.mxu0 0.0
        %1108 = vmatmul.mubr.f32.gmra.mrb[0].mxu0 %v323
        %v1109 = vpop.f32.mrb[0].mxu0
        %v1110 = vadd.f32 0.0, %v1109
        %v1111 = vpop.f32.mrb[0].mxu0
        %1112 = vmatprep.mubr.f32.mxu0 0.0
        %1113 = vmatmul.mubr.f32.gmra.mrb[0].mxu0 %v324
        %v1114 = vpop.f32.mrb[0].mxu0
        %v1115 = vadd.f32 0.0, %v1114
        %v1116 = vpop.f32.mrb[0].mxu0
        %1117 = vmatprep.mubr.f32.mxu0 0.0
        %1118 = vmatmul.mubr.f32.gmra.mrb[0].mxu0 %v325
        %v1119 = vpop.f32.mrb[0].mxu0
        %v1120 = vadd.f32 0.0, %v1119
        %v1121 = vpop.f32.mrb[0].mxu0
        %1122 = vmatprep.mubr.f32.mxu0 0.0
        %1123 = vmatmul.mubr.f32.gmra.mrb[0].mxu0 %v326
        %v1124 = vpop.f32.mrb[0].mxu0
        %v1125 = vadd.f32 0.0, %v1124
        %v1126 = vpop.f32.mrb[0].mxu0
        %1127 = vmatprep.mubr.f32.mxu0 0.0
        %1128 = vmatmul.mubr.f32.gmra.mrb[0].mxu0 %v327
        %v1129 = vpop.f32.mrb[0].mxu0
        %v1130 = vadd.f32 0.0, %v1129
        %v1131 = vpop.f32.mrb[0].mxu0
        %1132 = vmatprep.mubr.f32.mxu0 0.0
        %1133 = vmatmul.mubr.f32.gmra.mrb[0].mxu0 %v328
        %v1134 = vpop.f32.mrb[0].mxu0
        %v1135 = vadd.f32 0.0, %v1134
        %v1136 = vpop.f32.mrb[0].mxu0
        %1137 = vmatprep.mubr.f32.mxu0 0.0
        %1138 = vmatmul.mubr.f32.gmra.mrb[0].mxu0 %v329
        %v1139 = vpop.f32.mrb[0].mxu0
        %v1140 = vadd.f32 0.0, %v1139
        %v1141 = vpop.f32.mrb[0].mxu0
        %1142 = vmatprep.mubr.f32.mxu0 0.0
        %1143 = vmatmul.mubr.f32.gmra.mrb[0].mxu0 %v330
        %v1144 = vpop.f32.mrb[0].mxu0
        %v1145 = vadd.f32 0.0, %v1144
        %v1146 = vpop.f32.mrb[0].mxu0
        %1147 = vmatprep.mubr.f32.mxu0 0.0
        %1148 = vmatmul.mubr.f32.gmra.mrb[0].mxu0 %v331
        %v1149 = vpop.f32.mrb[0].mxu0
        %v1150 = vadd.f32 0.0, %v1149
        %v1151 = vpop.f32.mrb[0].mxu0
        %1152 = vmatprep.mubr.f32.mxu0 0.0
        %1153 = vmatmul.mubr.f32.gmra.mrb[0].mxu0 %v332
        %v1154 = vpop.f32.mrb[0].mxu0
        %v1155 = vadd.f32 0.0, %v1154
        %v1156 = vpop.f32.mrb[0].mxu0
        %1157 = vmatprep.mubr.f32.mxu0 0.0
        %1158 = vmatmul.mubr.f32.gmra.mrb[0].mxu0 %v333
        %v1159 = vpop.f32.mrb[0].mxu0
        %v1160 = vadd.f32 0.0, %v1159
        %v1161 = vpop.f32.mrb[0].mxu0
        %1162 = vmatprep.mubr.f32.mxu0 0.0
        %1163 = vmatmul.mubr.f32.gmra.mrb[0].mxu0 %v334
        %v1164 = vpop.f32.mrb[0].mxu0
        %v1165 = vadd.f32 0.0, %v1164
        %v1166 = vpop.f32.mrb[0].mxu0
        %1167 = vmatprep.mubr.f32.mxu0 0.0
        %1168 = vmatmul.mubr.f32.gmra.mrb[0].mxu0 %v335
        %v1169 = vpop.f32.mrb[0].mxu0
        %v1170 = vadd.f32 0.0, %v1169
        %v1171 = vpop.f32.mrb[0].mxu0
        %1172 = vmatprep.mubr.f32.mxu0 0.0
        %1173 = vmatmul.mubr.f32.gmra.mrb[0].mxu0 %v336
        %v1174 = vpop.f32.mrb[0].mxu0
        %v1175 = vadd.f32 0.0, %v1174
        %v1176 = vpop.f32.mrb[0].mxu0
        %1177 = vmatprep.mubr.f32.mxu0 0.0
        %1178 = vmatmul.mubr.f32.gmra.mrb[0].mxu0 %v337
        %v1179 = vpop.f32.mrb[0].mxu0
        %v1180 = vadd.f32 0.0, %v1179
        %v1181 = vpop.f32.mrb[0].mxu0
        %1182 = vmatprep.mubr.f32.mxu0 0.0
        %1183 = vmatmul.mubr.f32.gmra.mrb[0].mxu0 %v338
        %v1184 = vpop.f32.mrb[0].mxu0
        %v1185 = vadd.f32 0.0, %v1184
        %v1186 = vpop.f32.mrb[0].mxu0
        %1187 = vdwg.mxu0
        %v1188 = vpack.c.bf16 %v1035, %v1030
        %v1189 = vpack.c.bf16 %v1045, %v1040
        %v1190 = vpack.c.bf16 %v1055, %v1050
        %v1191 = vpack.c.bf16 %v1065, %v1060
        %v1192 = vpack.c.bf16 %v1075, %v1070
        %v1193 = vpack.c.bf16 %v1085, %v1080
        %v1194 = vpack.c.bf16 %v1095, %v1090
        %v1195 = vpack.c.bf16 %v1105, %v1100
        %v1196 = vpack.c.bf16 %v1115, %v1110
        %v1197 = vpack.c.bf16 %v1125, %v1120
        %v1198 = vpack.c.bf16 %v1135, %v1130
        %v1199 = vpack.c.bf16 %v1145, %v1140
        %v1200 = vpack.c.bf16 %v1155, %v1150
        %v1201 = vpack.c.bf16 %v1165, %v1160
        %v1202 = vpack.c.bf16 %v1175, %v1170
        %v1203 = vpack.c.bf16 %v1185, %v1180
        %v1220 = vunpack.c.l.b16 %v1188
        %v1221 = vunpack.c.h.b16 %v1188
        %v1222 = vunpack.c.l.b16 %v1189
        %v1223 = vunpack.c.h.b16 %v1189
        %v1224 = vunpack.c.l.b16 %v1190
        %v1225 = vunpack.c.h.b16 %v1190
        %v1226 = vunpack.c.l.b16 %v1191
        %v1227 = vunpack.c.h.b16 %v1191
        %v1228 = vunpack.c.l.b16 %v1192
        %v1229 = vunpack.c.h.b16 %v1192
        %v1230 = vunpack.c.l.b16 %v1193
        %v1231 = vunpack.c.h.b16 %v1193
        %v1232 = vunpack.c.l.b16 %v1194
        %v1233 = vunpack.c.h.b16 %v1194
        %v1234 = vunpack.c.l.b16 %v1195
        %v1235 = vunpack.c.h.b16 %v1195
        %v1236 = vunpack.c.l.b16 %v1196
        %v1237 = vunpack.c.h.b16 %v1196
        %v1238 = vunpack.c.l.b16 %v1197
        %v1239 = vunpack.c.h.b16 %v1197
        %v1240 = vunpack.c.l.b16 %v1198
        %v1241 = vunpack.c.h.b16 %v1198
        %v1242 = vunpack.c.l.b16 %v1199
        %v1243 = vunpack.c.h.b16 %v1199
        %v1244 = vunpack.c.l.b16 %v1200
        %v1245 = vunpack.c.h.b16 %v1200
        %v1246 = vunpack.c.l.b16 %v1201
        %v1247 = vunpack.c.h.b16 %v1201
        %v1248 = vunpack.c.l.b16 %v1202
        %v1249 = vunpack.c.h.b16 %v1202
        %v1250 = vunpack.c.l.b16 %v1203
        %v1251 = vunpack.c.h.b16 %v1203
        %v1252 = vpack.c.b16 %v1220, %v1220
        %v1253 = vpack.c.b16 %v1221, %v1221
        %v1254 = vpack.c.b16 %v1222, %v1222
        %v1255 = vpack.c.b16 %v1223, %v1223
        %v1256 = vpack.c.b16 %v1224, %v1224
        %v1257 = vpack.c.b16 %v1225, %v1225
        %v1258 = vpack.c.b16 %v1226, %v1226
        %v1259 = vpack.c.b16 %v1227, %v1227
        %v1260 = vpack.c.b16 %v1228, %v1228
        %v1261 = vpack.c.b16 %v1229, %v1229
        %v1262 = vpack.c.b16 %v1230, %v1230
        %v1263 = vpack.c.b16 %v1231, %v1231
        %v1264 = vpack.c.b16 %v1232, %v1232
        %v1265 = vpack.c.b16 %v1233, %v1233
        %v1266 = vpack.c.b16 %v1234, %v1234
        %v1267 = vpack.c.b16 %v1235, %v1235
        %v1268 = vpack.c.b16 %v1236, %v1236
        %v1269 = vpack.c.b16 %v1237, %v1237
        %v1270 = vpack.c.b16 %v1238, %v1238
        %v1271 = vpack.c.b16 %v1239, %v1239
        %v1272 = vpack.c.b16 %v1240, %v1240
        %v1273 = vpack.c.b16 %v1241, %v1241
        %v1274 = vpack.c.b16 %v1242, %v1242
        %v1275 = vpack.c.b16 %v1243, %v1243
        %v1276 = vpack.c.b16 %v1244, %v1244
        %v1277 = vpack.c.b16 %v1245, %v1245
        %v1278 = vpack.c.b16 %v1246, %v1246
        %v1279 = vpack.c.b16 %v1247, %v1247
        %v1280 = vpack.c.b16 %v1248, %v1248
        %v1281 = vpack.c.b16 %v1249, %v1249
        %v1282 = vpack.c.b16 %v1250, %v1250
        %v1283 = vpack.c.b16 %v1251, %v1251
        %s1316 = scalar_lea.vmem %s288, 128 [#allocation7]
        %1317 = vst [vmem:[%s1316] sm:$0xf] %v1252
        %1318 = vst [vmem:[%s1316 + $0x4] sm:$0xf] %v1253
        %1319 = vst [vmem:[%s1316 + $0x8] sm:$0xf] %v1254
        %1320 = vst [vmem:[%s1316 + $0xc] sm:$0xf] %v1255
        %1321 = vst [vmem:[%s1316 + $0x10] sm:$0xf] %v1256
        %1322 = vst [vmem:[%s1316 + $0x14] sm:$0xf] %v1257
        %1323 = vst [vmem:[%s1316 + $0x18] sm:$0xf] %v1258
        %1324 = vst [vmem:[%s1316 + $0x1c] sm:$0xf] %v1259
        %1325 = vst [vmem:[%s1316 + $0x20] sm:$0xf] %v1260
        %1326 = vst [vmem:[%s1316 + $0x24] sm:$0xf] %v1261
        %1327 = vst [vmem:[%s1316 + $0x28] sm:$0xf] %v1262
        %1328 = vst [vmem:[%s1316 + $0x2c] sm:$0xf] %v1263
        %1329 = vst [vmem:[%s1316 + $0x30] sm:$0xf] %v1264
        %1330 = vst [vmem:[%s1316 + $0x34] sm:$0xf] %v1265
        %1331 = vst [vmem:[%s1316 + $0x38] sm:$0xf] %v1266
        %1332 = vst [vmem:[%s1316 + $0x3c] sm:$0xf] %v1267
        %1333 = vst [vmem:[%s1316 + $0x40] sm:$0xf] %v1268
        %1334 = vst [vmem:[%s1316 + $0x44] sm:$0xf] %v1269
        %1335 = vst [vmem:[%s1316 + $0x48] sm:$0xf] %v1270
        %1336 = vst [vmem:[%s1316 + $0x4c] sm:$0xf] %v1271
        %1337 = vst [vmem:[%s1316 + $0x50] sm:$0xf] %v1272
        %1338 = vst [vmem:[%s1316 + $0x54] sm:$0xf] %v1273
        %1339 = vst [vmem:[%s1316 + $0x58] sm:$0xf] %v1274
        %1340 = vst [vmem:[%s1316 + $0x5c] sm:$0xf] %v1275
        %1341 = vst [vmem:[%s1316 + $0x60] sm:$0xf] %v1276
        %1342 = vst [vmem:[%s1316 + $0x64] sm:$0xf] %v1277
        %1343 = vst [vmem:[%s1316 + $0x68] sm:$0xf] %v1278
        %1344 = vst [vmem:[%s1316 + $0x6c] sm:$0xf] %v1279
        %1345 = vst [vmem:[%s1316 + $0x70] sm:$0xf] %v1280
        %1346 = vst [vmem:[%s1316 + $0x74] sm:$0xf] %v1281
        %1347 = vst [vmem:[%s1316 + $0x78] sm:$0xf] %v1282
        %1348 = vst [vmem:[%s1316 + $0x7c] sm:$0xf] %v1283
        %s1349 = scalar_lea.vmem %s2, 1
        %v1350 = vld [vmem:[%s1349] sm:$0x1]
        %v1352 = vlaneseq
        %v1353 = vshrl.u32 %v1352, 7
        %v1354 = vsub.s32 0, %v1353
        %v1355 = vrot.slane %v1350, %v1354
        %v1357 = vmul.f32 %v1030, %v1355
        %v1358 = vmul.f32 %v1035, %v1355
        %v1359 = vmul.f32 %v1040, %v1355
        %v1360 = vmul.f32 %v1045, %v1355
        %v1361 = vmul.f32 %v1050, %v1355
        %v1362 = vmul.f32 %v1055, %v1355
        %v1363 = vmul.f32 %v1060, %v1355
        %v1364 = vmul.f32 %v1065, %v1355
        %v1365 = vmul.f32 %v1070, %v1355
        %v1366 = vmul.f32 %v1075, %v1355
        %v1367 = vmul.f32 %v1080, %v1355
        %v1368 = vmul.f32 %v1085, %v1355
        %v1369 = vmul.f32 %v1090, %v1355
        %v1370 = vmul.f32 %v1095, %v1355
        %v1371 = vmul.f32 %v1100, %v1355
        %v1372 = vmul.f32 %v1105, %v1355
        %v1373 = vmul.f32 %v1110, %v1355
        %v1374 = vmul.f32 %v1115, %v1355
        %v1375 = vmul.f32 %v1120, %v1355
        %v1376 = vmul.f32 %v1125, %v1355
        %v1377 = vmul.f32 %v1130, %v1355
        %v1378 = vmul.f32 %v1135, %v1355
        %v1379 = vmul.f32 %v1140, %v1355
        %v1380 = vmul.f32 %v1145, %v1355
        %v1381 = vmul.f32 %v1150, %v1355
        %v1382 = vmul.f32 %v1155, %v1355
        %v1383 = vmul.f32 %v1160, %v1355
        %v1384 = vmul.f32 %v1165, %v1355
        %v1385 = vmul.f32 %v1170, %v1355
        %v1386 = vmul.f32 %v1175, %v1355
        %v1387 = vmul.f32 %v1180, %v1355
        %v1388 = vmul.f32 %v1185, %v1355
        %1389 = vadd.xlane.f32.xlu0 %v1357
        %v1390 = vpop.xlane.xlu0 %1389
        %1391 = vadd.xlane.f32.xlu0 %v1358
        %v1392 = vpop.xlane.xlu0 %1391
        %1393 = vadd.xlane.f32.xlu0 %v1359
        %v1394 = vpop.xlane.xlu0 %1393
        %1395 = vadd.xlane.f32.xlu0 %v1360
        %v1396 = vpop.xlane.xlu0 %1395
        %1397 = vadd.xlane.f32.xlu0 %v1361
        %v1398 = vpop.xlane.xlu0 %1397
        %1399 = vadd.xlane.f32.xlu0 %v1362
        %v1400 = vpop.xlane.xlu0 %1399
        %1401 = vadd.xlane.f32.xlu0 %v1363
        %v1402 = vpop.xlane.xlu0 %1401
        %1403 = vadd.xlane.f32.xlu0 %v1364
        %v1404 = vpop.xlane.xlu0 %1403
        %1405 = vadd.xlane.f32.xlu0 %v1365
        %v1406 = vpop.xlane.xlu0 %1405
        %1407 = vadd.xlane.f32.xlu0 %v1366
        %v1408 = vpop.xlane.xlu0 %1407
        %1409 = vadd.xlane.f32.xlu0 %v1367
        %v1410 = vpop.xlane.xlu0 %1409
        %1411 = vadd.xlane.f32.xlu0 %v1368
        %v1412 = vpop.xlane.xlu0 %1411
        %1413 = vadd.xlane.f32.xlu0 %v1369
        %v1414 = vpop.xlane.xlu0 %1413
        %1415 = vadd.xlane.f32.xlu0 %v1370
        %v1416 = vpop.xlane.xlu0 %1415
        %1417 = vadd.xlane.f32.xlu0 %v1371
        %v1418 = vpop.xlane.xlu0 %1417
        %1419 = vadd.xlane.f32.xlu0 %v1372
        %v1420 = vpop.xlane.xlu0 %1419
        %1421 = vadd.xlane.f32.xlu0 %v1373
        %v1422 = vpop.xlane.xlu0 %1421
        %1423 = vadd.xlane.f32.xlu0 %v1374
        %v1424 = vpop.xlane.xlu0 %1423
        %1425 = vadd.xlane.f32.xlu0 %v1375
        %v1426 = vpop.xlane.xlu0 %1425
        %1427 = vadd.xlane.f32.xlu0 %v1376
        %v1428 = vpop.xlane.xlu0 %1427
        %1429 = vadd.xlane.f32.xlu0 %v1377
        %v1430 = vpop.xlane.xlu0 %1429
        %1431 = vadd.xlane.f32.xlu0 %v1378
        %v1432 = vpop.xlane.xlu0 %1431
        %1433 = vadd.xlane.f32.xlu0 %v1379
        %v1434 = vpop.xlane.xlu0 %1433
        %1435 = vadd.xlane.f32.xlu0 %v1380
        %v1436 = vpop.xlane.xlu0 %1435
        %1437 = vadd.xlane.f32.xlu0 %v1381
        %v1438 = vpop.xlane.xlu0 %1437
        %1439 = vadd.xlane.f32.xlu0 %v1382
        %v1440 = vpop.xlane.xlu0 %1439
        %1441 = vadd.xlane.f32.xlu0 %v1383
        %v1442 = vpop.xlane.xlu0 %1441
        %1443 = vadd.xlane.f32.xlu0 %v1384
        %v1444 = vpop.xlane.xlu0 %1443
        %1445 = vadd.xlane.f32.xlu0 %v1385
        %v1446 = vpop.xlane.xlu0 %1445
        %1447 = vadd.xlane.f32.xlu0 %v1386
        %v1448 = vpop.xlane.xlu0 %1447
        %1449 = vadd.xlane.f32.xlu0 %v1387
        %v1450 = vpop.xlane.xlu0 %1449
        %1451 = vadd.xlane.f32.xlu0 %v1388
        %v1452 = vpop.xlane.xlu0 %1451
        %s1453 = scalar_lea.vmem %s3, 1
        %v1454 = vld [vmem:[%s1453] sm:$0x1]
        %v1456 = vlaneseq
        %v1457 = vshrl.u32 %v1456, 7
        %v1458 = vsub.s32 0, %v1457
        %v1459 = vrot.slane %v1454, %v1458
        %v1461 = vmul.f32 %v1030, %v1459
        %v1462 = vmul.f32 %v1035, %v1459
        %v1463 = vmul.f32 %v1040, %v1459
        %v1464 = vmul.f32 %v1045, %v1459
        %v1465 = vmul.f32 %v1050, %v1459
        %v1466 = vmul.f32 %v1055, %v1459
        %v1467 = vmul.f32 %v1060, %v1459
        %v1468 = vmul.f32 %v1065, %v1459
        %v1469 = vmul.f32 %v1070, %v1459
        %v1470 = vmul.f32 %v1075, %v1459
        %v1471 = vmul.f32 %v1080, %v1459
        %v1472 = vmul.f32 %v1085, %v1459
        %v1473 = vmul.f32 %v1090, %v1459
        %v1474 = vmul.f32 %v1095, %v1459
        %v1475 = vmul.f32 %v1100, %v1459
        %v1476 = vmul.f32 %v1105, %v1459
        %v1477 = vmul.f32 %v1110, %v1459
        %v1478 = vmul.f32 %v1115, %v1459
        %v1479 = vmul.f32 %v1120, %v1459
        %v1480 = vmul.f32 %v1125, %v1459
        %v1481 = vmul.f32 %v1130, %v1459
        %v1482 = vmul.f32 %v1135, %v1459
        %v1483 = vmul.f32 %v1140, %v1459
        %v1484 = vmul.f32 %v1145, %v1459
        %v1485 = vmul.f32 %v1150, %v1459
        %v1486 = vmul.f32 %v1155, %v1459
        %v1487 = vmul.f32 %v1160, %v1459
        %v1488 = vmul.f32 %v1165, %v1459
        %v1489 = vmul.f32 %v1170, %v1459
        %v1490 = vmul.f32 %v1175, %v1459
        %v1491 = vmul.f32 %v1180, %v1459
        %v1492 = vmul.f32 %v1185, %v1459
        %1493 = vadd.xlane.f32.xlu0 %v1461
        %v1494 = vpop.xlane.xlu0 %1493
        %1495 = vadd.xlane.f32.xlu0 %v1462
        %v1496 = vpop.xlane.xlu0 %1495
        %1497 = vadd.xlane.f32.xlu0 %v1463
        %v1498 = vpop.xlane.xlu0 %1497
        %1499 = vadd.xlane.f32.xlu0 %v1464
        %v1500 = vpop.xlane.xlu0 %1499
        %1501 = vadd.xlane.f32.xlu0 %v1465
        %v1502 = vpop.xlane.xlu0 %1501
        %1503 = vadd.xlane.f32.xlu0 %v1466
        %v1504 = vpop.xlane.xlu0 %1503
        %1505 = vadd.xlane.f32.xlu0 %v1467
        %v1506 = vpop.xlane.xlu0 %1505
        %1507 = vadd.xlane.f32.xlu0 %v1468
        %v1508 = vpop.xlane.xlu0 %1507
        %1509 = vadd.xlane.f32.xlu0 %v1469
        %v1510 = vpop.xlane.xlu0 %1509
        %1511 = vadd.xlane.f32.xlu0 %v1470
        %v1512 = vpop.xlane.xlu0 %1511
        %1513 = vadd.xlane.f32.xlu0 %v1471
        %v1514 = vpop.xlane.xlu0 %1513
        %1515 = vadd.xlane.f32.xlu0 %v1472
        %v1516 = vpop.xlane.xlu0 %1515
        %1517 = vadd.xlane.f32.xlu0 %v1473
        %v1518 = vpop.xlane.xlu0 %1517
        %1519 = vadd.xlane.f32.xlu0 %v1474
        %v1520 = vpop.xlane.xlu0 %1519
        %1521 = vadd.xlane.f32.xlu0 %v1475
        %v1522 = vpop.xlane.xlu0 %1521
        %1523 = vadd.xlane.f32.xlu0 %v1476
        %v1524 = vpop.xlane.xlu0 %1523
        %1525 = vadd.xlane.f32.xlu0 %v1477
        %v1526 = vpop.xlane.xlu0 %1525
        %1527 = vadd.xlane.f32.xlu0 %v1478
        %v1528 = vpop.xlane.xlu0 %1527
        %1529 = vadd.xlane.f32.xlu0 %v1479
        %v1530 = vpop.xlane.xlu0 %1529
        %1531 = vadd.xlane.f32.xlu0 %v1480
        %v1532 = vpop.xlane.xlu0 %1531
        %1533 = vadd.xlane.f32.xlu0 %v1481
        %v1534 = vpop.xlane.xlu0 %1533
        %1535 = vadd.xlane.f32.xlu0 %v1482
        %v1536 = vpop.xlane.xlu0 %1535
        %1537 = vadd.xlane.f32.xlu0 %v1483
        %v1538 = vpop.xlane.xlu0 %1537
        %1539 = vadd.xlane.f32.xlu0 %v1484
        %v1540 = vpop.xlane.xlu0 %1539
        %1541 = vadd.xlane.f32.xlu0 %v1485
        %v1542 = vpop.xlane.xlu0 %1541
        %1543 = vadd.xlane.f32.xlu0 %v1486
        %v1544 = vpop.xlane.xlu0 %1543
        %1545 = vadd.xlane.f32.xlu0 %v1487
        %v1546 = vpop.xlane.xlu0 %1545
        %1547 = vadd.xlane.f32.xlu0 %v1488
        %v1548 = vpop.xlane.xlu0 %1547
        %1549 = vadd.xlane.f32.xlu0 %v1489
        %v1550 = vpop.xlane.xlu0 %1549
        %1551 = vadd.xlane.f32.xlu0 %v1490
        %v1552 = vpop.xlane.xlu0 %1551
        %1553 = vadd.xlane.f32.xlu0 %v1491
        %v1554 = vpop.xlane.xlu0 %1553
        %1555 = vadd.xlane.f32.xlu0 %v1492
        %v1556 = vpop.xlane.xlu0 %1555
        %vm1557 = vcmask 7168
        %v1558 = vsel %vm1557, %v780, %v1390
        %v1559 = vsel %vm1557, %v782, %v1392
        %v1560 = vsel %vm1557, %v784, %v1394
        %v1561 = vsel %vm1557, %v786, %v1396
        %v1562 = vsel %vm1557, %v788, %v1398
        %v1563 = vsel %vm1557, %v790, %v1400
        %v1564 = vsel %vm1557, %v792, %v1402
        %v1565 = vsel %vm1557, %v794, %v1404
        %v1566 = vsel %vm1557, %v796, %v1406
        %v1567 = vsel %vm1557, %v798, %v1408
        %v1568 = vsel %vm1557, %v800, %v1410
        %v1569 = vsel %vm1557, %v802, %v1412
        %v1570 = vsel %vm1557, %v804, %v1414
        %v1571 = vsel %vm1557, %v806, %v1416
        %v1572 = vsel %vm1557, %v808, %v1418
        %v1573 = vsel %vm1557, %v810, %v1420
        %v1574 = vsel %vm1557, %v812, %v1422
        %v1575 = vsel %vm1557, %v814, %v1424
        %v1576 = vsel %vm1557, %v816, %v1426
        %v1577 = vsel %vm1557, %v818, %v1428
        %v1578 = vsel %vm1557, %v820, %v1430
        %v1579 = vsel %vm1557, %v822, %v1432
        %v1580 = vsel %vm1557, %v824, %v1434
        %v1581 = vsel %vm1557, %v826, %v1436
        %v1582 = vsel %vm1557, %v828, %v1438
        %v1583 = vsel %vm1557, %v830, %v1440
        %v1584 = vsel %vm1557, %v832, %v1442
        %v1585 = vsel %vm1557, %v834, %v1444
        %v1586 = vsel %vm1557, %v836, %v1446
        %v1587 = vsel %vm1557, %v838, %v1448
        %v1588 = vsel %vm1557, %v840, %v1450
        %v1589 = vsel %vm1557, %v842, %v1452
        %vm1590 = vcmask 15360
        %v1591 = vsel %vm1590, %v1558, 0.0
        %v1592 = vsel %vm1590, %v1559, 0.0
        %v1593 = vsel %vm1590, %v1560, 0.0
        %v1594 = vsel %vm1590, %v1561, 0.0
        %v1595 = vsel %vm1590, %v1562, 0.0
        %v1596 = vsel %vm1590, %v1563, 0.0
        %v1597 = vsel %vm1590, %v1564, 0.0
        %v1598 = vsel %vm1590, %v1565, 0.0
        %v1599 = vsel %vm1590, %v1566, 0.0
        %v1600 = vsel %vm1590, %v1567, 0.0
        %v1601 = vsel %vm1590, %v1568, 0.0
        %v1602 = vsel %vm1590, %v1569, 0.0
        %v1603 = vsel %vm1590, %v1570, 0.0
        %v1604 = vsel %vm1590, %v1571, 0.0
        %v1605 = vsel %vm1590, %v1572, 0.0
        %v1606 = vsel %vm1590, %v1573, 0.0
        %v1607 = vsel %vm1590, %v1574, 0.0
        %v1608 = vsel %vm1590, %v1575, 0.0
        %v1609 = vsel %vm1590, %v1576, 0.0
        %v1610 = vsel %vm1590, %v1577, 0.0
        %v1611 = vsel %vm1590, %v1578, 0.0
        %v1612 = vsel %vm1590, %v1579, 0.0
        %v1613 = vsel %vm1590, %v1580, 0.0
        %v1614 = vsel %vm1590, %v1581, 0.0
        %v1615 = vsel %vm1590, %v1582, 0.0
        %v1616 = vsel %vm1590, %v1583, 0.0
        %v1617 = vsel %vm1590, %v1584, 0.0
        %v1618 = vsel %vm1590, %v1585, 0.0
        %v1619 = vsel %vm1590, %v1586, 0.0
        %v1620 = vsel %vm1590, %v1587, 0.0
        %v1621 = vsel %vm1590, %v1588, 0.0
        %v1622 = vsel %vm1590, %v1589, 0.0
        %1623 = vst [vmem:[%s295] sm:$0xff] %v1591
        %1624 = vst [vmem:[%s295 + $0x8] sm:$0xff] %v1592
        %1625 = vst [vmem:[%s295 + $0x10] sm:$0xff] %v1593
        %1626 = vst [vmem:[%s295 + $0x18] sm:$0xff] %v1594
        %1627 = vst [vmem:[%s295 + $0x20] sm:$0xff] %v1595
        %1628 = vst [vmem:[%s295 + $0x28] sm:$0xff] %v1596
        %1629 = vst [vmem:[%s295 + $0x30] sm:$0xff] %v1597
        %1630 = vst [vmem:[%s295 + $0x38] sm:$0xff] %v1598
        %1631 = vst [vmem:[%s295 + $0x40] sm:$0xff] %v1599
        %1632 = vst [vmem:[%s295 + $0x48] sm:$0xff] %v1600
        %1633 = vst [vmem:[%s295 + $0x50] sm:$0xff] %v1601
        %1634 = vst [vmem:[%s295 + $0x58] sm:$0xff] %v1602
        %1635 = vst [vmem:[%s295 + $0x60] sm:$0xff] %v1603
        %1636 = vst [vmem:[%s295 + $0x68] sm:$0xff] %v1604
        %1637 = vst [vmem:[%s295 + $0x70] sm:$0xff] %v1605
        %1638 = vst [vmem:[%s295 + $0x78] sm:$0xff] %v1606
        %1639 = vst [vmem:[%s295 + $0x80] sm:$0xff] %v1607
        %1640 = vst [vmem:[%s295 + $0x88] sm:$0xff] %v1608
        %1641 = vst [vmem:[%s295 + $0x90] sm:$0xff] %v1609
        %1642 = vst [vmem:[%s295 + $0x98] sm:$0xff] %v1610
        %1643 = vst [vmem:[%s295 + $0xa0] sm:$0xff] %v1611
        %1644 = vst [vmem:[%s295 + $0xa8] sm:$0xff] %v1612
        %1645 = vst [vmem:[%s295 + $0xb0] sm:$0xff] %v1613
        %1646 = vst [vmem:[%s295 + $0xb8] sm:$0xff] %v1614
        %1647 = vst [vmem:[%s295 + $0xc0] sm:$0xff] %v1615
        %1648 = vst [vmem:[%s295 + $0xc8] sm:$0xff] %v1616
        %1649 = vst [vmem:[%s295 + $0xd0] sm:$0xff] %v1617
        %1650 = vst [vmem:[%s295 + $0xd8] sm:$0xff] %v1618
        %1651 = vst [vmem:[%s295 + $0xe0] sm:$0xff] %v1619
        %1652 = vst [vmem:[%s295 + $0xe8] sm:$0xff] %v1620
        %1653 = vst [vmem:[%s295 + $0xf0] sm:$0xff] %v1621
        %1654 = vst [vmem:[%s295 + $0xf8] sm:$0xff] %v1622
        %v1655 = vsel %vm1557, %v883, %v1494
        %v1656 = vsel %vm1557, %v885, %v1496
        %v1657 = vsel %vm1557, %v887, %v1498
        %v1658 = vsel %vm1557, %v889, %v1500
        %v1659 = vsel %vm1557, %v891, %v1502
        %v1660 = vsel %vm1557, %v893, %v1504
        %v1661 = vsel %vm1557, %v895, %v1506
        %v1662 = vsel %vm1557, %v897, %v1508
        %v1663 = vsel %vm1557, %v899, %v1510
        %v1664 = vsel %vm1557, %v901, %v1512
        %v1665 = vsel %vm1557, %v903, %v1514
        %v1666 = vsel %vm1557, %v905, %v1516
        %v1667 = vsel %vm1557, %v907, %v1518
        %v1668 = vsel %vm1557, %v909, %v1520
        %v1669 = vsel %vm1557, %v911, %v1522
        %v1670 = vsel %vm1557, %v913, %v1524
        %v1671 = vsel %vm1557, %v915, %v1526
        %v1672 = vsel %vm1557, %v917, %v1528
        %v1673 = vsel %vm1557, %v919, %v1530
        %v1674 = vsel %vm1557, %v921, %v1532
        %v1675 = vsel %vm1557, %v923, %v1534
        %v1676 = vsel %vm1557, %v925, %v1536
        %v1677 = vsel %vm1557, %v927, %v1538
        %v1678 = vsel %vm1557, %v929, %v1540
        %v1679 = vsel %vm1557, %v931, %v1542
        %v1680 = vsel %vm1557, %v933, %v1544
        %v1681 = vsel %vm1557, %v935, %v1546
        %v1682 = vsel %vm1557, %v937, %v1548
        %v1683 = vsel %vm1557, %v939, %v1550
        %v1684 = vsel %vm1557, %v941, %v1552
        %v1685 = vsel %vm1557, %v943, %v1554
        %v1686 = vsel %vm1557, %v945, %v1556
        %v1687 = vsel %vm1590, %v1655, 0.0
        %v1688 = vsel %vm1590, %v1656, 0.0
        %v1689 = vsel %vm1590, %v1657, 0.0
        %v1690 = vsel %vm1590, %v1658, 0.0
        %v1691 = vsel %vm1590, %v1659, 0.0
        %v1692 = vsel %vm1590, %v1660, 0.0
        %v1693 = vsel %vm1590, %v1661, 0.0
        %v1694 = vsel %vm1590, %v1662, 0.0
        %v1695 = vsel %vm1590, %v1663, 0.0
        %v1696 = vsel %vm1590, %v1664, 0.0
        %v1697 = vsel %vm1590, %v1665, 0.0
        %v1698 = vsel %vm1590, %v1666, 0.0
        %v1699 = vsel %vm1590, %v1667, 0.0
        %v1700 = vsel %vm1590, %v1668, 0.0
        %v1701 = vsel %vm1590, %v1669, 0.0
        %v1702 = vsel %vm1590, %v1670, 0.0
        %v1703 = vsel %vm1590, %v1671, 0.0
        %v1704 = vsel %vm1590, %v1672, 0.0
        %v1705 = vsel %vm1590, %v1673, 0.0
        %v1706 = vsel %vm1590, %v1674, 0.0
        %v1707 = vsel %vm1590, %v1675, 0.0
        %v1708 = vsel %vm1590, %v1676, 0.0
        %v1709 = vsel %vm1590, %v1677, 0.0
        %v1710 = vsel %vm1590, %v1678, 0.0
        %v1711 = vsel %vm1590, %v1679, 0.0
        %v1712 = vsel %vm1590, %v1680, 0.0
        %v1713 = vsel %vm1590, %v1681, 0.0
        %v1714 = vsel %vm1590, %v1682, 0.0
        %v1715 = vsel %vm1590, %v1683, 0.0
        %v1716 = vsel %vm1590, %v1684, 0.0
        %v1717 = vsel %vm1590, %v1685, 0.0
        %v1718 = vsel %vm1590, %v1686, 0.0
        %1719 = vst [vmem:[%s302] sm:$0xff] %v1687
        %1720 = vst [vmem:[%s302 + $0x8] sm:$0xff] %v1688
        %1721 = vst [vmem:[%s302 + $0x10] sm:$0xff] %v1689
        %1722 = vst [vmem:[%s302 + $0x18] sm:$0xff] %v1690
        %1723 = vst [vmem:[%s302 + $0x20] sm:$0xff] %v1691
        %1724 = vst [vmem:[%s302 + $0x28] sm:$0xff] %v1692
        %1725 = vst [vmem:[%s302 + $0x30] sm:$0xff] %v1693
        %1726 = vst [vmem:[%s302 + $0x38] sm:$0xff] %v1694
        %1727 = vst [vmem:[%s302 + $0x40] sm:$0xff] %v1695
        %1728 = vst [vmem:[%s302 + $0x48] sm:$0xff] %v1696
        %1729 = vst [vmem:[%s302 + $0x50] sm:$0xff] %v1697
        %1730 = vst [vmem:[%s302 + $0x58] sm:$0xff] %v1698
        %1731 = vst [vmem:[%s302 + $0x60] sm:$0xff] %v1699
        %1732 = vst [vmem:[%s302 + $0x68] sm:$0xff] %v1700
        %1733 = vst [vmem:[%s302 + $0x70] sm:$0xff] %v1701
        %1734 = vst [vmem:[%s302 + $0x78] sm:$0xff] %v1702
        %1735 = vst [vmem:[%s302 + $0x80] sm:$0xff] %v1703
        %1736 = vst [vmem:[%s302 + $0x88] sm:$0xff] %v1704
        %1737 = vst [vmem:[%s302 + $0x90] sm:$0xff] %v1705
        %1738 = vst [vmem:[%s302 + $0x98] sm:$0xff] %v1706
        %1739 = vst [vmem:[%s302 + $0xa0] sm:$0xff] %v1707
        %1740 = vst [vmem:[%s302 + $0xa8] sm:$0xff] %v1708
        %1741 = vst [vmem:[%s302 + $0xb0] sm:$0xff] %v1709
        %1742 = vst [vmem:[%s302 + $0xb8] sm:$0xff] %v1710
        %1743 = vst [vmem:[%s302 + $0xc0] sm:$0xff] %v1711
        %1744 = vst [vmem:[%s302 + $0xc8] sm:$0xff] %v1712
        %1745 = vst [vmem:[%s302 + $0xd0] sm:$0xff] %v1713
        %1746 = vst [vmem:[%s302 + $0xd8] sm:$0xff] %v1714
        %1747 = vst [vmem:[%s302 + $0xe0] sm:$0xff] %v1715
        %1748 = vst [vmem:[%s302 + $0xe8] sm:$0xff] %v1716
        %1749 = vst [vmem:[%s302 + $0xf0] sm:$0xff] %v1717
        %1750 = vst [vmem:[%s302 + $0xf8] sm:$0xff] %v1718
        %s1751 = sand.u32 %s125, 1
        %s1752 = scalar_lea.sflag [#allocation4], %s1751
        %s1753 = sand.u32 %s125, 1
        %s1754 = smul.addr %s1753, 256
        %s1755 = scalar_lea.vmem [#allocation7], %s1754
        %s1756 = sand.u32 %s28, 1
        %s1757 = scalar_lea.sflag [#allocation9], %s1756
        %s1758 = sand.u32 %s151, 1
        %s1759 = smul.addr %s1758, 256
        %s1760 = scalar_lea.vmem [#allocation8], %s1759
        %s1761 = sand.u32 %s28, 1
        %s1762 = scalar_lea.sflag [#allocation9], %s1761
        %s1763 = sand.u32 %s177, 1
        %s1764 = smul.addr %s1763, 256
        %s1765 = scalar_lea.vmem [#allocation10], %s1764
        // Predicated region
        $region45: #{tpu_custom_call.1} parent=35 // pred_check
          %p1766 = pneg %p135
        $region46: #{tpu_custom_call.1} parent=35 // pred_check_branch
          %1768 = sbr.rel (%p1766) target = $region48
        $region47: #{tpu_custom_call.1} parent=35 // pred_region
          #allocation12 [shape = 'u32[6]{0}', space=smem, size = 0x18, scoped, tag = 'DMA stride descriptor']
          %s1769 = smul.u32 32, %s28
          %s1771 = ssub.s32 4096, 4096
          %1772 = vsyncadd %s1752, %s1771
          %s1773 = smul.addr %s1769, 64
          %s1774 = scalar_lea.hbm %s4, %s1773
          %s1776 = sshll.u32 1, 14
          %s1777 = sxor.u32 4294967295, %s1776
          %s1780 = sshll.u32 7, 18
          %s1781 = sxor.u32 4294967295, %s1780
          %s1782 = sand.u32 0, %s1781
          %s1784 = sor.u32 %s1782, 0
          %s1786 = sshll.u32 3, 24
          %s1787 = sxor.u32 4294967295, %s1786
          %s1788 = sand.u32 %s1784, %s1787
          %s1790 = sor.u32 %s1788, 0
          %s1791 = sshll.u32 %s1755, 4
          %s1792 = int_to_ptr.vmem [resolvable:$true] %s1791
          %1798 = sst [smem:[#allocation12]] 2048
          %s1799 = scalar_lea.smem [#allocation12], 1
          %1800 = sst [smem:[%s1799]] 6144
          %s1801 = scalar_lea.smem [#allocation12], 2
          %1802 = sst [smem:[%s1801]] 32
          %s1803 = scalar_lea.smem [#allocation12], 3
          %1804 = sst [smem:[%s1803]] 64
          %s1805 = scalar_lea.smem [#allocation12], 4
          %1806 = sst [smem:[%s1805]] 64
          %s1807 = scalar_lea.smem [#allocation12], 5
          %1808 = sst [smem:[%s1807]] 4
          %1810 = dma.general %s1792, 4096, %s1774, %s1752, [#allocation11], [#allocation12], %s1790, 0
        $region48: #{tpu_custom_call.1} parent=35 // pred_fallthru
          _
        // Predicated region
        $region49: #{tpu_custom_call.1} parent=35 // pred_check
          %p1811 = pneg %p161
        $region50: #{tpu_custom_call.1} parent=35 // pred_check_branch
          %1813 = sbr.rel (%p1811) target = $region52
        $region51: #{tpu_custom_call.1} parent=35 // pred_region
          %s1814 = smul.u32 32, %s28
          %s1816 = ssub.s32 4096, 4096
          %1817 = vsyncadd %s1757, %s1816
          %s1818 = smul.addr %s1814, 128
          %s1819 = scalar_lea.hbm %s5, %s1818
          %s1820 = sshll.u32 %s1760, 4
          %s1821 = int_to_ptr.vmem [resolvable:$true] %s1820
          %1826 = dma.vmem_to_hbm [thread:$0]  %s1821, 4096, %s1819, %s1757, 128, 128, 8
        $region52: #{tpu_custom_call.1} parent=35 // pred_fallthru
          _
        // Predicated region
        $region53: #{tpu_custom_call.1} parent=35 // pred_check
          %p1827 = pneg %p187
        $region54: #{tpu_custom_call.1} parent=35 // pred_check_branch
          %1829 = sbr.rel (%p1827) target = $region56
        $region55: #{tpu_custom_call.1} parent=35 // pred_region
          %s1830 = smul.u32 32, %s28
          %s1832 = ssub.s32 4096, 4096
          %1833 = vsyncadd %s1762, %s1832
          %s1834 = smul.addr %s1830, 128
          %s1835 = scalar_lea.hbm %s6, %s1834
          %s1836 = sshll.u32 %s1765, 4
          %s1837 = int_to_ptr.vmem [resolvable:$true] %s1836
          %1842 = dma.vmem_to_hbm [thread:$0]  %s1837, 4096, %s1835, %s1762, 128, 128, 8
        $region56: #{tpu_custom_call.1} parent=35 // pred_fallthru
          _
      $region36: #{tpu_custom_call.1} parent=5 // pred_fallthru
        _
      %p1843 = scmp.le.s32.totalorder 2, %s23
      // Predicated region
      $region57: #{tpu_custom_call.1} parent=5 // pred_check
        %p1844 = pneg %p1843
      $region58: #{tpu_custom_call.1} parent=5 // pred_check_branch
        %1846 = sbr.rel (%p1844) target = $region60
      $region59: #{tpu_custom_call.1} parent=5 // pred_region
        %s1847 = ssub.s32 %s23, 2
        // Predicated region
        $region61: #{tpu_custom_call.1} parent=59 // pred_check
          %p1848 = pneg %p141
        $region62: #{tpu_custom_call.1} parent=59 // pred_check_branch
          %1850 = sbr.rel (%p1848) target = $region64
        $region63: #{tpu_custom_call.1} parent=59 // pred_region
          %s1851 = sand.u32 %s126, 1
          %s1852 = scalar_lea.sflag [#allocation4], %s1851
          %s1853 = sand.u32 %s126, 1
          %s1854 = smul.addr %s1853, 256
          %s1855 = scalar_lea.vmem [#allocation7], %s1854
          %1856 = dma.done %s1852, 4096
        $region64: #{tpu_custom_call.1} parent=59 // pred_fallthru
          _
        // Predicated region
        $region65: #{tpu_custom_call.1} parent=59 // pred_check
          %p1857 = pneg %p167
        $region66: #{tpu_custom_call.1} parent=59 // pred_check_branch
          %1859 = sbr.rel (%p1857) target = $region68
        $region67: #{tpu_custom_call.1} parent=59 // pred_region
          %s1860 = sand.u32 %s29, 1
          %s1861 = scalar_lea.sflag [#allocation9], %s1860
          %s1862 = sand.u32 %s152, 1
          %s1863 = smul.addr %s1862, 256
          %s1864 = scalar_lea.vmem [#allocation8], %s1863
          %1865 = dma.done %s1861, 4096
        $region68: #{tpu_custom_call.1} parent=59 // pred_fallthru
          _
        // Predicated region
        $region69: #{tpu_custom_call.1} parent=59 // pred_check
          %p1866 = pneg %p193
        $region70: #{tpu_custom_call.1} parent=59 // pred_check_branch
          %1868 = sbr.rel (%p1866) target = $region72
        $region71: #{tpu_custom_call.1} parent=59 // pred_region
          %s1869 = sand.u32 %s29, 1
          %s1870 = scalar_lea.sflag [#allocation9], %s1869
          %s1871 = sand.u32 %s178, 1
          %s1872 = smul.addr %s1871, 256
          %s1873 = scalar_lea.vmem [#allocation10], %s1872
          %1874 = dma.done %s1870, 4096
        $region72: #{tpu_custom_call.1} parent=59 // pred_fallthru
          _
      $region60: #{tpu_custom_call.1} parent=5 // pred_fallthru
        _
    $region6: #{tpu_custom_call.1} parent=1 // loop_footer
      %s27 = sadd.s32 1, %s23
    $region7: #{tpu_custom_call.1} parent=1 // loop_footer_branch
      %22 = sbr.rel target = $region3
    $region8: #{tpu_custom_call.1} parent=1 // loop_exit
      _
    %1875 = vsyncpa [#allocation3], 1
    %s1876 = scalar_lea.sflag [#allocation3], 1
    %1877 = vsyncpa %s1876, 1
    %1878 = vsyncpa [#allocation6], 1
    %1879 = vsyncpa [#allocation4], 1
    %s1880 = scalar_lea.sflag [#allocation4], 1
    %1881 = vsyncpa %s1880, 1
    %1882 = vsyncpa [#allocation9], 1
    %s1883 = scalar_lea.sflag [#allocation9], 1
    %1884 = vsyncpa %s1883, 1

</llo_original>
